<compile_context>
chip_gen: v6e
topology: v6e:2x2x1
jax: 0.10.0
libtpu: 0.0.40
codegen_flags: <defaults>
</compile_context>

<pallas_src>
import functools

import jax
import jax.numpy as jnp
from jax import lax
from jax.experimental import pallas as pl
from jax.experimental.pallas import tpu as pltpu

NDF = 64
BN_EPS = 1e-5
LEAKY_SLOPE = 0.2


def _leaky_relu(x):
    return jnp.where(x >= 0, x, LEAKY_SLOPE * x)


def _conv1(x_ref, w1_ref, b1_ref):
    """conv1 on the MXU: (ndf, c_in) bf16 @ (c_in, TP) bf16 -> f32 acc, + bias, LeakyReLU."""
    h1 = jnp.dot(w1_ref[...], x_ref[...], preferred_element_type=jnp.float32)
    return _leaky_relu(h1 + b1_ref[...])


def _stats_kernel(x_ref, w1_ref, b1_ref, s_ref, g_ref, *, valid_hw, tile_p, need_mask):
    """Phase 1: per-batch accumulation of s = sum_p h1 (ndf,1) and G = h1 @ h1^T (ndf,ndf)."""
    t = pl.program_id(1)

    @pl.when(t == 0)
    def _():
        s_ref[...] = jnp.zeros_like(s_ref)
        g_ref[...] = jnp.zeros_like(g_ref)

    h1 = _conv1(x_ref, w1_ref, b1_ref)                       # (ndf, TP) f32
    if need_mask:
        # zero out zero-padded tail pixels so they don't pollute the BN statistics
        lane = lax.broadcasted_iota(jnp.int32, (1, tile_p), 1)
        h1 = jnp.where(t * tile_p + lane < valid_hw, h1, 0.0)

    s_ref[...] += jnp.sum(h1, axis=1, keepdims=True)         # (ndf, 1)
    # Gram matrix on the MXU (f32, contraction over the pixel tile; no explicit transpose).
    g_ref[...] += lax.dot_general(h1, h1, (((1,), (1,)), ((), ())),
                                  preferred_element_type=jnp.float32)   # (ndf, ndf)


def _apply_kernel(x_ref, w1_ref, b1_ref, w2_ref, scale_ref, shift_ref, w3t_ref, o_ref):
    """Phase 2: h1 -> conv2 (bf16 MXU) -> folded BN affine -> LeakyReLU -> conv3 (MXU)."""
    h1 = _conv1(x_ref, w1_ref, b1_ref)                       # (ndf, TP) f32
    h2 = jnp.dot(w2_ref[...], h1.astype(jnp.bfloat16),
                 preferred_element_type=jnp.float32)         # (2*ndf, TP)
    # BatchNorm folded into one FMA: scale = gamma*rsqrt(var+eps), shift = beta - mean*scale
    h3 = _leaky_relu(h2 * scale_ref[...] + shift_ref[...])
    # conv3 (2*ndf -> 1) on the MXU; output stays lane-dense (1, TP).
    o_ref[...] = jnp.dot(w3t_ref[...], h3,
                         preferred_element_type=jnp.float32).astype(o_ref.dtype)


def _round_up(x, m):
    return (x + m - 1) // m * m


def _tile_config(hw):
    """Pick the largest pixel tile fitting the per-generation VMEM budget."""
    tile_cap, vmem_limit = 4096, 32 * 1024 * 1024            # safe for v7x (64 MiB VMEM)
    try:
        if pltpu.get_tpu_info().vmem_capacity_bytes >= 100 * 1024 * 1024:
            tile_cap, vmem_limit = 8192, 64 * 1024 * 1024    # v5e / v6e (128 MiB VMEM)
    except Exception:
        pass
    tile_p = min(tile_cap, _round_up(hw, 128))               # multiple of 128 by construction
    hw_pad = _round_up(hw, tile_p)
    return tile_p, hw_pad, vmem_limit


def pixel_discriminator(x_nchw, params):
    """x_nchw: (N, C_in, H, W) float32.  Returns (N, 1, H, W) float32."""
    n, c_in, h, w = x_nchw.shape
    hw = h * w
    p_total = n * hw
    tile_p, hw_pad, vmem_limit = _tile_config(hw)
    n_tiles = hw_pad // tile_p

    w1, b1, w2, gamma, beta, w3 = params
    ndf = w1.shape[0]
    ch2 = w2.shape[0]
    w1_bf16 = w1.astype(jnp.bfloat16)
    w2_bf16 = w2.astype(jnp.bfloat16)
    w3t = w3.reshape(1, ch2)                                  # (1, 2*ndf)

    # Free reshape of NCHW memory: channels on sublanes, pixels on lanes.  Pad the pixel
    # axis to a tile multiple (padded pixels are masked out of the statistics and sliced
    # off the output) and cast to bf16 once (halves HBM traffic, feeds the MXU directly).
    x = x_nchw.reshape(n, c_in, hw)
    if hw_pad != hw:
        x = jnp.pad(x, ((0, 0), (0, 0), (0, hw_pad - hw)))
    x = x.astype(jnp.bfloat16)

    grid = (n, n_tiles)
    x_spec = pl.BlockSpec((None, c_in, tile_p), lambda i, t: (i, 0, t))

    def const_spec(shape):
        # Full-array block, constant index_map -> DMA'd once, stays VMEM-resident.
        return pl.BlockSpec(shape, lambda i, t: (0,) * len(shape))

    # ---- Phase 1: Gram-matrix BN statistics (per-batch partials; batch axis parallel) ----
    stats = functools.partial(_stats_kernel, valid_hw=hw, tile_p=tile_p,
                              need_mask=(hw_pad != hw))
    s_part, g_part = pl.pallas_call(
        stats,
        grid=grid,
        in_specs=[x_spec,
                  const_spec((ndf, c_in)),
                  const_spec((ndf, 1))],
        out_specs=[pl.BlockSpec((None, ndf, 1), lambda i, t: (i, 0, 0)),
                   pl.BlockSpec((None, ndf, ndf), lambda i, t: (i, 0, 0))],
        out_shape=[jax.ShapeDtypeStruct((n, ndf, 1), jnp.float32),
                   jax.ShapeDtypeStruct((n, ndf, ndf), jnp.float32)],
        compiler_params=pltpu.CompilerParams(
            dimension_semantics=("parallel", "arbitrary"),
            vmem_limit_bytes=vmem_limit),
    )(x, w1_bf16, b1)

    # Tiny JAX epilogue: recover conv2-output statistics from (s, G) and fold BN.
    # Use the bf16-rounded conv2 weights so the statistics match phase 2's bf16 matmul.
    s = jnp.sum(s_part, axis=0)                               # (ndf, 1)
    g = jnp.sum(g_part, axis=0)                               # (ndf, ndf)
    w2_r = w2_bf16.astype(jnp.float32)
    sum_h2 = w2_r @ s                                         # (2*ndf, 1)
    sumsq_h2 = jnp.sum((w2_r @ g) * w2_r, axis=1, keepdims=True)  # (2*ndf, 1)
    p_f = jnp.float32(p_total)
    mean = sum_h2 / p_f
    var = jnp.maximum(sumsq_h2 / p_f - mean * mean, 0.0)      # biased (training-mode BN)
    scale = gamma * lax.rsqrt(var + BN_EPS)                   # (2*ndf, 1)
    shift = beta - mean * scale                               # (2*ndf, 1)
    # TODO(synk): PyTorch BatchNorm2d also updates running_mean/running_var in training
    # mode; those buffer updates are not produced here (forward output is unaffected).

    # ---- Phase 2: recompute h1/h2, folded BN, LeakyReLU, conv3 (fully parallel grid) ----
    out = pl.pallas_call(
        _apply_kernel,
        grid=grid,
        in_specs=[x_spec,
                  const_spec((ndf, c_in)),
                  const_spec((ndf, 1)),
                  const_spec((ch2, ndf)),
                  const_spec((ch2, 1)),
                  const_spec((ch2, 1)),
                  const_spec((1, ch2))],
        out_specs=pl.BlockSpec((None, 1, tile_p), lambda i, t: (i, 0, t)),
        out_shape=jax.ShapeDtypeStruct((n, 1, hw_pad), jnp.float32),
        compiler_params=pltpu.CompilerParams(
            dimension_semantics=("parallel", "parallel"),
            vmem_limit_bytes=vmem_limit),
    )(x, w1_bf16, b1, w2_bf16, scale, shift, w3t)

    return out[:, :, :hw].reshape(n, 1, h, w)


def init_params(key, input_nc, ndf=NDF):
    """Deterministic synthetic parameters (PyTorch conv weights with k=1 squeezed)."""
    k1, k2, k3, kb = jax.random.split(key, 4)
    w1 = 0.02 * jax.random.normal(k1, (ndf, input_nc), jnp.float32)   # conv1.weight[:, :, 0, 0]
    b1 = 0.01 * jax.random.normal(kb, (ndf, 1), jnp.float32)          # conv1.bias[:, None]
    w2 = 0.02 * jax.random.normal(k2, (2 * ndf, ndf), jnp.float32)    # conv2.weight[:, :, 0, 0]
    gamma = jnp.ones((2 * ndf, 1), jnp.float32)                       # BN affine defaults
    beta = jnp.zeros((2 * ndf, 1), jnp.float32)
    w3 = 0.02 * jax.random.normal(k3, (2 * ndf, 1), jnp.float32)      # conv3.weight[0, :, 0, 0][:, None]
    return (w1, b1, w2, gamma, beta, w3)


def reference_forward(x_nchw, params):
    """Pure-JAX f32 reference matching the PyTorch module's forward."""
    w1, b1, w2, gamma, beta, w3 = params
    n, c_in, h, w = x_nchw.shape
    xp = jnp.transpose(x_nchw, (0, 2, 3, 1)).reshape(-1, c_in)        # (P, C_in)
    h1 = _leaky_relu(xp @ w1.T + b1[:, 0])
    h2 = h1 @ w2.T
    mean = jnp.mean(h2, axis=0)
    var = jnp.var(h2, axis=0)                                          # biased (training-mode BN)
    h2n = (h2 - mean) * lax.rsqrt(var + BN_EPS) * gamma[:, 0] + beta[:, 0]
    out = _leaky_relu(h2n) @ w3                                        # (P, 1)
    return jnp.transpose(out.reshape(n, h, w, 1), (0, 3, 1, 2))


if __name__ == "__main__":
    key = jax.random.PRNGKey(0)
    kx, kp = jax.random.split(key)

    N, C_IN, H, W = 2, 4, 16, 16
    x = jax.random.normal(kx, (N, C_IN, H, W), jnp.float32)
    params = init_params(kp, C_IN)

    fwd = jax.jit(functools.partial(pixel_discriminator, params=params))
    out = fwd(x)
    jax.block_until_ready(out)

    assert out.shape == (N, 1, H, W), out.shape
    assert out.dtype == jnp.float32

    ref = reference_forward(x, params)
    max_err = float(jnp.max(jnp.abs(out - ref)))
    assert max_err < 2e-2, f"max abs err {max_err}"  # bf16 conv1/conv2 tolerance

    print("KERNEL_OK")
</pallas_src>

<mosaic_0001>
module attributes {stable_mosaic.version = 11 : i64} {
  func.func @_stats_kernel(%arg0: i32, %arg1: i32, %arg2: memref<1x4x256xbf16, #tpu.memory_space<vmem>>, %arg3: memref<64x4xbf16, #tpu.memory_space<vmem>>, %arg4: memref<64x1xf32, #tpu.memory_space<vmem>>, %arg5: memref<1x64x1xf32, #tpu.memory_space<vmem>>, %arg6: memref<1x64x64xf32, #tpu.memory_space<vmem>>) attributes {dimension_semantics = [#tpu.dimension_semantics<parallel>, #tpu.dimension_semantics<arbitrary>], iteration_bounds = array<i64: 2, 1>, scalar_prefetch = 0 : i64, scratch_operands = 0 : i64, tpu.core_type = #tpu.core_type<tc>, window_params = [{transform_indices = @transform_0, window_bounds = array<i64: 1, 4, 256>}, {pipeline_mode = #tpu.pipeline_mode<synchronous>, transform_indices = @transform_1, window_bounds = array<i64: 64, 4>}, {pipeline_mode = #tpu.pipeline_mode<synchronous>, transform_indices = @transform_2, window_bounds = array<i64: 64, 1>}, {transform_indices = @transform_3, window_bounds = array<i64: 1, 64, 1>}, {transform_indices = @transform_4, window_bounds = array<i64: 1, 64, 64>}]} {
    %c0_i32 = arith.constant 0 : i32
    %0 = arith.cmpi eq, %arg1, %c0_i32 : i32
    %1 = arith.extui %0 : i1 to i32
    %c0_i32_0 = arith.constant 0 : i32
    %2 = arith.cmpi ne, %1, %c0_i32_0 : i32
    scf.if %2 {
      %cst_23 = arith.constant 0.000000e+00 : f32
      %30 = vector.broadcast %cst_23 : f32 to vector<64x1xf32>
      %c0_24 = arith.constant 0 : index
      %c0_25 = arith.constant 0 : index
      %c0_26 = arith.constant 0 : index
      %31 = vector.load %arg5[%c0_24, %c0_25, %c0_26] : memref<1x64x1xf32, #tpu.memory_space<vmem>>, vector<1x64x1xf32>
      %32 = vector.shape_cast %31 : vector<1x64x1xf32> to vector<64x1xf32>
      %33 = vector.shape_cast %30 : vector<64x1xf32> to vector<1x64x1xf32>
      tpu.vector_store %arg5[%c0_24, %c0_25, %c0_26], %33 {strides = array<i32>} : memref<1x64x1xf32, #tpu.memory_space<vmem>>, vector<1x64x1xf32>,
      %cst_27 = arith.constant 0.000000e+00 : f32
      %34 = vector.broadcast %cst_27 : f32 to vector<64x64xf32>
      %c0_28 = arith.constant 0 : index
      %c0_29 = arith.constant 0 : index
      %c0_30 = arith.constant 0 : index
      %35 = vector.load %arg6[%c0_28, %c0_29, %c0_30] : memref<1x64x64xf32, #tpu.memory_space<vmem>>, vector<1x64x64xf32>
      %36 = vector.shape_cast %35 : vector<1x64x64xf32> to vector<64x64xf32>
      %37 = vector.shape_cast %34 : vector<64x64xf32> to vector<1x64x64xf32>
      tpu.vector_store %arg6[%c0_28, %c0_29, %c0_30], %37 {strides = array<i32>} : memref<1x64x64xf32, #tpu.memory_space<vmem>>, vector<1x64x64xf32>,
    } else {
    }
    %c0 = arith.constant 0 : index
    %c0_1 = arith.constant 0 : index
    %3 = vector.load %arg3[%c0, %c0_1] : memref<64x4xbf16, #tpu.memory_space<vmem>>, vector<64x4xbf16>
    %c0_2 = arith.constant 0 : index
    %c0_3 = arith.constant 0 : index
    %c0_4 = arith.constant 0 : index
    %4 = vector.load %arg2[%c0_2, %c0_3, %c0_4] : memref<1x4x256xbf16, #tpu.memory_space<vmem>>, vector<1x4x256xbf16>
    %5 = vector.shape_cast %4 : vector<1x4x256xbf16> to vector<4x256xbf16>
    %cst = arith.constant dense<0.000000e+00> : vector<64x256xf32>
    %6 = tpu.matmul %3, %5, %cst {dimension_numbers = #tpu.dot_dimension_numbers<[1], [0], [0], [1], [0, 0, 1, 1], [], []>} : vector<64x4xbf16>, vector<4x256xbf16>, vector<64x256xf32> -> vector<64x256xf32>
    %c0_5 = arith.constant 0 : index
    %c0_6 = arith.constant 0 : index
    %7 = vector.load %arg4[%c0_5, %c0_6] : memref<64x1xf32, #tpu.memory_space<vmem>>, vector<64x1xf32>
    %8 = vector.broadcast %7 : vector<64x1xf32> to vector<64x256xf32>
    %9 = arith.addf %6, %8 : vector<64x256xf32>
    %cst_7 = arith.constant 0.000000e+00 : f32
    %10 = vector.broadcast %cst_7 : f32 to vector<64x256xf32>
    %11 = arith.cmpf oge, %9, %10 : vector<64x256xf32>
    %cst_8 = arith.constant 2.000000e-01 : f32
    %12 = vector.broadcast %cst_8 : f32 to vector<64x256xf32>
    %13 = arith.mulf %12, %9 : vector<64x256xf32>
    %14 = arith.select %11, %9, %13 : vector<64x256xi1>, vector<64x256xf32>
    %c0_9 = arith.constant 0 : index
    %c0_10 = arith.constant 0 : index
    %c0_11 = arith.constant 0 : index
    %15 = vector.load %arg5[%c0_9, %c0_10, %c0_11] : memref<1x64x1xf32, #tpu.memory_space<vmem>>, vector<1x64x1xf32>
    %16 = vector.shape_cast %15 : vector<1x64x1xf32> to vector<64x1xf32>
    %cst_12 = arith.constant dense<0.000000e+00> : vector<64xf32>
    %17 = vector.multi_reduction <add>, %14, %cst_12 [1] : vector<64x256xf32> to vector<64xf32>
    %18 = vector.shape_cast %17 : vector<64xf32> to vector<64x1xf32>
    %19 = arith.addf %16, %18 : vector<64x1xf32>
    %c0_13 = arith.constant 0 : index
    %c0_14 = arith.constant 0 : index
    %c0_15 = arith.constant 0 : index
    %20 = vector.load %arg5[%c0_13, %c0_14, %c0_15] : memref<1x64x1xf32, #tpu.memory_space<vmem>>, vector<1x64x1xf32>
    %21 = vector.shape_cast %20 : vector<1x64x1xf32> to vector<64x1xf32>
    %22 = vector.shape_cast %19 : vector<64x1xf32> to vector<1x64x1xf32>
    tpu.vector_store %arg5[%c0_13, %c0_14, %c0_15], %22 {strides = array<i32>} : memref<1x64x1xf32, #tpu.memory_space<vmem>>, vector<1x64x1xf32>,
    %c0_16 = arith.constant 0 : index
    %c0_17 = arith.constant 0 : index
    %c0_18 = arith.constant 0 : index
    %23 = vector.load %arg6[%c0_16, %c0_17, %c0_18] : memref<1x64x64xf32, #tpu.memory_space<vmem>>, vector<1x64x64xf32>
    %24 = vector.shape_cast %23 : vector<1x64x64xf32> to vector<64x64xf32>
    %cst_19 = arith.constant dense<0.000000e+00> : vector<64x64xf32>
    %25 = tpu.matmul %14, %14, %cst_19 {dimension_numbers = #tpu.dot_dimension_numbers<[1], [1], [0], [0], [0, 0, 1, 0], [], []>} : vector<64x256xf32>, vector<64x256xf32>, vector<64x64xf32> -> vector<64x64xf32>
    %26 = arith.addf %24, %25 : vector<64x64xf32>
    %c0_20 = arith.constant 0 : index
    %c0_21 = arith.constant 0 : index
    %c0_22 = arith.constant 0 : index
    %27 = vector.load %arg6[%c0_20, %c0_21, %c0_22] : memref<1x64x64xf32, #tpu.memory_space<vmem>>, vector<1x64x64xf32>
    %28 = vector.shape_cast %27 : vector<1x64x64xf32> to vector<64x64xf32>
    %29 = vector.shape_cast %26 : vector<64x64xf32> to vector<1x64x64xf32>
    tpu.vector_store %arg6[%c0_20, %c0_21, %c0_22], %29 {strides = array<i32>} : memref<1x64x64xf32, #tpu.memory_space<vmem>>, vector<1x64x64xf32>,
    return
  }
  func.func @transform_0(%arg0: i32, %arg1: i32) -> (i32, i32, i32) {
    %c0_i32 = arith.constant 0 : i32
    %c0_i32_0 = arith.constant 0 : i32
    return %arg0, %c0_i32, %arg1 : i32, i32, i32
  }
  func.func @transform_1(%arg0: i32, %arg1: i32) -> (i32, i32) {
    %c0_i32 = arith.constant 0 : i32
    %c0_i32_0 = arith.constant 0 : i32
    %c0_i32_1 = arith.constant 0 : i32
    return %c0_i32, %c0_i32_0 : i32, i32
  }
  func.func @transform_2(%arg0: i32, %arg1: i32) -> (i32, i32) {
    %c0_i32 = arith.constant 0 : i32
    %c0_i32_0 = arith.constant 0 : i32
    %c0_i32_1 = arith.constant 0 : i32
    return %c0_i32, %c0_i32_0 : i32, i32
  }
  func.func @transform_3(%arg0: i32, %arg1: i32) -> (i32, i32, i32) {
    %c0_i32 = arith.constant 0 : i32
    %c0_i32_0 = arith.constant 0 : i32
    %c0_i32_1 = arith.constant 0 : i32
    return %arg0, %c0_i32, %c0_i32_0 : i32, i32, i32
  }
  func.func @transform_4(%arg0: i32, %arg1: i32) -> (i32, i32, i32) {
    %c0_i32 = arith.constant 0 : i32
    %c0_i32_0 = arith.constant 0 : i32
    %c0_i32_1 = arith.constant 0 : i32
    return %arg0, %c0_i32, %c0_i32_0 : i32, i32, i32
  }
}

module attributes {stable_mosaic.version = 11 : i64} {
  func.func @_apply_kernel(%arg0: i32, %arg1: i32, %arg2: memref<1x4x256xbf16, #tpu.memory_space<vmem>>, %arg3: memref<64x4xbf16, #tpu.memory_space<vmem>>, %arg4: memref<64x1xf32, #tpu.memory_space<vmem>>, %arg5: memref<128x64xbf16, #tpu.memory_space<vmem>>, %arg6: memref<128x1xf32, #tpu.memory_space<vmem>>, %arg7: memref<128x1xf32, #tpu.memory_space<vmem>>, %arg8: memref<1x128xf32, #tpu.memory_space<vmem>>, %arg9: memref<1x1x256xf32, #tpu.memory_space<vmem>>) attributes {dimension_semantics = [#tpu.dimension_semantics<parallel>, #tpu.dimension_semantics<parallel>], iteration_bounds = array<i64: 2, 1>, scalar_prefetch = 0 : i64, scratch_operands = 0 : i64, tpu.core_type = #tpu.core_type<tc>, window_params = [{transform_indices = @transform_0, window_bounds = array<i64: 1, 4, 256>}, {pipeline_mode = #tpu.pipeline_mode<synchronous>, transform_indices = @transform_1, window_bounds = array<i64: 64, 4>}, {pipeline_mode = #tpu.pipeline_mode<synchronous>, transform_indices = @transform_2, window_bounds = array<i64: 64, 1>}, {pipeline_mode = #tpu.pipeline_mode<synchronous>, transform_indices = @transform_3, window_bounds = array<i64: 128, 64>}, {pipeline_mode = #tpu.pipeline_mode<synchronous>, transform_indices = @transform_4, window_bounds = array<i64: 128, 1>}, {pipeline_mode = #tpu.pipeline_mode<synchronous>, transform_indices = @transform_5, window_bounds = array<i64: 128, 1>}, {pipeline_mode = #tpu.pipeline_mode<synchronous>, transform_indices = @transform_6, window_bounds = array<i64: 1, 128>}, {transform_indices = @transform_7, window_bounds = array<i64: 1, 1, 256>}]} {
    %c0 = arith.constant 0 : index
    %c0_0 = arith.constant 0 : index
    %0 = vector.load %arg3[%c0, %c0_0] : memref<64x4xbf16, #tpu.memory_space<vmem>>, vector<64x4xbf16>
    %c0_1 = arith.constant 0 : index
    %c0_2 = arith.constant 0 : index
    %c0_3 = arith.constant 0 : index
    %1 = vector.load %arg2[%c0_1, %c0_2, %c0_3] : memref<1x4x256xbf16, #tpu.memory_space<vmem>>, vector<1x4x256xbf16>
    %2 = vector.shape_cast %1 : vector<1x4x256xbf16> to vector<4x256xbf16>
    %cst = arith.constant dense<0.000000e+00> : vector<64x256xf32>
    %3 = tpu.matmul %0, %2, %cst {dimension_numbers = #tpu.dot_dimension_numbers<[1], [0], [0], [1], [0, 0, 1, 1], [], []>} : vector<64x4xbf16>, vector<4x256xbf16>, vector<64x256xf32> -> vector<64x256xf32>
    %c0_4 = arith.constant 0 : index
    %c0_5 = arith.constant 0 : index
    %4 = vector.load %arg4[%c0_4, %c0_5] : memref<64x1xf32, #tpu.memory_space<vmem>>, vector<64x1xf32>
    %5 = vector.broadcast %4 : vector<64x1xf32> to vector<64x256xf32>
    %6 = arith.addf %3, %5 : vector<64x256xf32>
    %cst_6 = arith.constant 0.000000e+00 : f32
    %7 = vector.broadcast %cst_6 : f32 to vector<64x256xf32>
    %8 = arith.cmpf oge, %6, %7 : vector<64x256xf32>
    %cst_7 = arith.constant 2.000000e-01 : f32
    %9 = vector.broadcast %cst_7 : f32 to vector<64x256xf32>
    %10 = arith.mulf %9, %6 : vector<64x256xf32>
    %11 = arith.select %8, %6, %10 : vector<64x256xi1>, vector<64x256xf32>
    %c0_8 = arith.constant 0 : index
    %c0_9 = arith.constant 0 : index
    %12 = vector.load %arg5[%c0_8, %c0_9] : memref<128x64xbf16, #tpu.memory_space<vmem>>, vector<128x64xbf16>
    %13 = arith.truncf %11 : vector<64x256xf32> to vector<64x256xbf16>
    %cst_10 = arith.constant dense<0.000000e+00> : vector<128x256xf32>
    %14 = tpu.matmul %12, %13, %cst_10 {dimension_numbers = #tpu.dot_dimension_numbers<[1], [0], [0], [1], [0, 0, 1, 1], [], []>} : vector<128x64xbf16>, vector<64x256xbf16>, vector<128x256xf32> -> vector<128x256xf32>
    %c0_11 = arith.constant 0 : index
    %c0_12 = arith.constant 0 : index
    %15 = vector.load %arg6[%c0_11, %c0_12] : memref<128x1xf32, #tpu.memory_space<vmem>>, vector<128x1xf32>
    %16 = vector.broadcast %15 : vector<128x1xf32> to vector<128x256xf32>
    %17 = arith.mulf %14, %16 : vector<128x256xf32>
    %c0_13 = arith.constant 0 : index
    %c0_14 = arith.constant 0 : index
    %18 = vector.load %arg7[%c0_13, %c0_14] : memref<128x1xf32, #tpu.memory_space<vmem>>, vector<128x1xf32>
    %19 = vector.broadcast %18 : vector<128x1xf32> to vector<128x256xf32>
    %20 = arith.addf %17, %19 : vector<128x256xf32>
    %cst_15 = arith.constant 0.000000e+00 : f32
    %21 = vector.broadcast %cst_15 : f32 to vector<128x256xf32>
    %22 = arith.cmpf oge, %20, %21 : vector<128x256xf32>
    %cst_16 = arith.constant 2.000000e-01 : f32
    %23 = vector.broadcast %cst_16 : f32 to vector<128x256xf32>
    %24 = arith.mulf %23, %20 : vector<128x256xf32>
    %25 = arith.select %22, %20, %24 : vector<128x256xi1>, vector<128x256xf32>
    %c0_17 = arith.constant 0 : index
    %c0_18 = arith.constant 0 : index
    %26 = vector.load %arg8[%c0_17, %c0_18] : memref<1x128xf32, #tpu.memory_space<vmem>>, vector<1x128xf32>
    %cst_19 = arith.constant dense<0.000000e+00> : vector<1x256xf32>
    %27 = tpu.matmul %26, %25, %cst_19 {dimension_numbers = #tpu.dot_dimension_numbers<[1], [0], [0], [1], [0, 0, 1, 1], [], []>} : vector<1x128xf32>, vector<128x256xf32>, vector<1x256xf32> -> vector<1x256xf32>
    %c0_20 = arith.constant 0 : index
    %c0_21 = arith.constant 0 : index
    %c0_22 = arith.constant 0 : index
    %28 = vector.load %arg9[%c0_20, %c0_21, %c0_22] : memref<1x1x256xf32, #tpu.memory_space<vmem>>, vector<1x1x256xf32>
    %29 = vector.shape_cast %28 : vector<1x1x256xf32> to vector<1x256xf32>
    %30 = vector.shape_cast %27 : vector<1x256xf32> to vector<1x1x256xf32>
    tpu.vector_store %arg9[%c0_20, %c0_21, %c0_22], %30 {strides = array<i32>} : memref<1x1x256xf32, #tpu.memory_space<vmem>>, vector<1x1x256xf32>,
    return
  }
  func.func @transform_0(%arg0: i32, %arg1: i32) -> (i32, i32, i32) {
    %c0_i32 = arith.constant 0 : i32
    %c0_i32_0 = arith.constant 0 : i32
    return %arg0, %c0_i32, %arg1 : i32, i32, i32
  }
  func.func @transform_1(%arg0: i32, %arg1: i32) -> (i32, i32) {
    %c0_i32 = arith.constant 0 : i32
    %c0_i32_0 = arith.constant 0 : i32
    %c0_i32_1 = arith.constant 0 : i32
    return %c0_i32, %c0_i32_0 : i32, i32
  }
  func.func @transform_2(%arg0: i32, %arg1: i32) -> (i32, i32) {
    %c0_i32 = arith.constant 0 : i32
    %c0_i32_0 = arith.constant 0 : i32
    %c0_i32_1 = arith.constant 0 : i32
    return %c0_i32, %c0_i32_0 : i32, i32
  }
  func.func @transform_3(%arg0: i32, %arg1: i32) -> (i32, i32) {
    %c0_i32 = arith.constant 0 : i32
    %c0_i32_0 = arith.constant 0 : i32
    %c0_i32_1 = arith.constant 0 : i32
    return %c0_i32, %c0_i32_0 : i32, i32
  }
  func.func @transform_4(%arg0: i32, %arg1: i32) -> (i32, i32) {
    %c0_i32 = arith.constant 0 : i32
    %c0_i32_0 = arith.constant 0 : i32
    %c0_i32_1 = arith.constant 0 : i32
    return %c0_i32, %c0_i32_0 : i32, i32
  }
  func.func @transform_5(%arg0: i32, %arg1: i32) -> (i32, i32) {
    %c0_i32 = arith.constant 0 : i32
    %c0_i32_0 = arith.constant 0 : i32
    %c0_i32_1 = arith.constant 0 : i32
    return %c0_i32, %c0_i32_0 : i32, i32
  }
  func.func @transform_6(%arg0: i32, %arg1: i32) -> (i32, i32) {
    %c0_i32 = arith.constant 0 : i32
    %c0_i32_0 = arith.constant 0 : i32
    %c0_i32_1 = arith.constant 0 : i32
    return %c0_i32, %c0_i32_0 : i32, i32
  }
  func.func @transform_7(%arg0: i32, %arg1: i32) -> (i32, i32, i32) {
    %c0_i32 = arith.constant 0 : i32
    %c0_i32_0 = arith.constant 0 : i32
    return %arg0, %c0_i32, %arg1 : i32, i32, i32
  }
}

</mosaic_0001>

<llo_original>
// kernel: pixel_discriminator.2
$region0: #{pixel_discriminator.2}
  #allocation0 [shape = 'u32[]', space=smem, size = 0x4, offset = 0x4, fixed_abs, tag = 'smem constant byte address 0x4 - core index']
  #allocation1 [shape = 'u32[144,128]{1,0:T(1,128)}', space=vmem, size = 0x12000, scoped, tag = 'internal scratch']
  %s0 = inlined_call_operand.vmem [shape: bf16[2,4,256], index: 0, kind: input, shape index: {}]
  %s1 = inlined_call_operand.vmem [shape: bf16[64,4], index: 1, kind: input, shape index: {}]
  %s2 = inlined_call_operand.vmem [shape: f32[64,1], index: 2, kind: input, shape index: {}]
  %s3 = inlined_call_operand.vmem [shape: f32[2,64,1], index: 3, kind: output, shape index: {0}]
  %s4 = inlined_call_operand.vmem [shape: f32[2,64,64], index: 4, kind: output, shape index: {1}]
  %5 = xla_tuple %s3, %s4
  %s6 = sld [smem:[#allocation0]]
  $region57: #{pixel_discriminator.2} parent=0
    _
  %s8 = ssub.s32 1, %s6
  %s9 = scalar_select 0, %s8, %s6
  loop: start=0, step=1, limit=4
  $region2: #{pixel_discriminator.2} parent=0 // loop_pre_header
    _
  $region3: #{pixel_discriminator.2} parent=0 // loop_header
    %s11 = sphi 0, %s15
    %p12 = scmp.ge.s32.totalorder %s11, 4
    %s18 = sphi 0, %s30
    %s19 = sphi 0, %s26
    %s20 = sphi 0, %s18
    %s21 = sphi 0, %s19
    %s22 = sphi 0, %s20
    %s23 = sphi 0, %s21
    %s35 = sphi 0, %s37
    %s38 = sphi 0, %s35
    %s39 = sphi 0, %s38
    %s55 = sphi 0, %s39
    %s59 = sphi 0, %s59
    %s61 = sphi 0, %s59
    %s62 = sphi 0, %s61
    %s76 = sphi 0, %s62
    %s80 = sphi 0, %s80
    %s82 = sphi 0, %s80
    %s83 = sphi 0, %s82
    %s97 = sphi 0, %s83
    %s103 = sphi 0, %s105
    %s106 = sphi 0, %s103
    %s107 = sphi 0, %s106
    %s123 = sphi 0, %s107
    %s129 = sphi 0, %s131
    %s132 = sphi 0, %s129
    %s133 = sphi 0, %s132
    %s149 = sphi 0, %s133
  $region4: #{pixel_discriminator.2} parent=0 // loop_header_branch
    %14 = sbr.rel (%p12) target = $region8
  $region5: #{pixel_discriminator.2} parent=0 // loop_body
    %s16 = ssub.s32 %s11, 1
    %s17 = ssub.s32 %s11, 2
    %s24 = sadd.s32 1, %s19
    %p25 = scmp.ge.s32.totalorder %s24, 1
    %s26 = scalar_select %p25, 0, %s24
    %s27 = sadd.s32 1, %s18
    %s28 = scalar_select %p25, %s27, %s18
    %p29 = scmp.ge.s32.totalorder %s28, 2
    %s30 = scalar_select %p29, 0, %s28
    %s31 = ssub.s32 %s18, %s30
    %s32 = ssub.s32 %s19, %s26
    %s33 = sor.u32 %s31, %s32
    %p34 = scmp.eq.s32.totalorder %s33, 0
    %s36 = sadd.s32 %s35, 1
    %s37 = scalar_select %p34, %s35, %s36
    %p40 = pneg %p34
    %p41 = scmp.eq.s32.totalorder %s11, 1
    %p42 = por %p40, %p41
    %p43 = scmp.ne.s32.totalorder %s35, %s38
    %p44 = scmp.eq.s32.totalorder %s11, 0
    %p45 = por %p43, %p44
    %p46 = scmp.ne.s32.totalorder %s35, %s38
    %p47 = scmp.eq.s32.totalorder %s16, 1
    %p48 = por %p46, %p47
    %p49 = scmp.ne.s32.totalorder %s38, %s39
    %p50 = scmp.eq.s32.totalorder %s16, 0
    %p51 = por %p49, %p50
    %p52 = scmp.ne.s32.totalorder %s38, %s39
    %p53 = scmp.eq.s32.totalorder %s17, 1
    %p54 = por %p52, %p53
    %p56 = scmp.ne.s32.totalorder %s39, %s55
    %p57 = scmp.eq.s32.totalorder %s17, 0
    %p58 = por %p56, %p57
    %s60 = sadd.s32 %s59, 1
    %p63 = scmp.eq.s32.totalorder %s11, 1
    %p64 = scmp.ne.s32.totalorder %s59, %s61
    %p65 = scmp.eq.s32.totalorder %s11, 0
    %p66 = por %p64, %p65
    %p67 = scmp.ne.s32.totalorder %s59, %s61
    %p68 = scmp.eq.s32.totalorder %s16, 1
    %p69 = por %p67, %p68
    %p70 = scmp.ne.s32.totalorder %s61, %s62
    %p71 = scmp.eq.s32.totalorder %s16, 0
    %p72 = por %p70, %p71
    %p73 = scmp.ne.s32.totalorder %s61, %s62
    %p74 = scmp.eq.s32.totalorder %s17, 1
    %p75 = por %p73, %p74
    %p77 = scmp.ne.s32.totalorder %s62, %s76
    %p78 = scmp.eq.s32.totalorder %s17, 0
    %p79 = por %p77, %p78
    %s81 = sadd.s32 %s80, 1
    %p84 = scmp.eq.s32.totalorder %s11, 1
    %p85 = scmp.ne.s32.totalorder %s80, %s82
    %p86 = scmp.eq.s32.totalorder %s11, 0
    %p87 = por %p85, %p86
    %p88 = scmp.ne.s32.totalorder %s80, %s82
    %p89 = scmp.eq.s32.totalorder %s16, 1
    %p90 = por %p88, %p89
    %p91 = scmp.ne.s32.totalorder %s82, %s83
    %p92 = scmp.eq.s32.totalorder %s16, 0
    %p93 = por %p91, %p92
    %p94 = scmp.ne.s32.totalorder %s82, %s83
    %p95 = scmp.eq.s32.totalorder %s17, 1
    %p96 = por %p94, %p95
    %p98 = scmp.ne.s32.totalorder %s83, %s97
    %p99 = scmp.eq.s32.totalorder %s17, 0
    %p100 = por %p98, %p99
    %s101 = ssub.s32 %s18, %s30
    %p102 = scmp.eq.s32.totalorder %s101, 0
    %s104 = sadd.s32 %s103, 1
    %s105 = scalar_select %p102, %s103, %s104
    %p108 = pneg %p102
    %p109 = scmp.eq.s32.totalorder %s11, 1
    %p110 = por %p108, %p109
    %p111 = scmp.ne.s32.totalorder %s103, %s106
    %p112 = scmp.eq.s32.totalorder %s11, 0
    %p113 = por %p111, %p112
    %p114 = scmp.ne.s32.totalorder %s103, %s106
    %p115 = scmp.eq.s32.totalorder %s16, 1
    %p116 = por %p114, %p115
    %p117 = scmp.ne.s32.totalorder %s106, %s107
    %p118 = scmp.eq.s32.totalorder %s16, 0
    %p119 = por %p117, %p118
    %p120 = scmp.ne.s32.totalorder %s106, %s107
    %p121 = scmp.eq.s32.totalorder %s17, 1
    %p122 = por %p120, %p121
    %p124 = scmp.ne.s32.totalorder %s107, %s123
    %p125 = scmp.eq.s32.totalorder %s17, 0
    %p126 = por %p124, %p125
    %s127 = ssub.s32 %s18, %s30
    %p128 = scmp.eq.s32.totalorder %s127, 0
    %s130 = sadd.s32 %s129, 1
    %s131 = scalar_select %p128, %s129, %s130
    %p134 = pneg %p128
    %p135 = scmp.eq.s32.totalorder %s11, 1
    %p136 = por %p134, %p135
    %p137 = scmp.ne.s32.totalorder %s129, %s132
    %p138 = scmp.eq.s32.totalorder %s11, 0
    %p139 = por %p137, %p138
    %p140 = scmp.ne.s32.totalorder %s129, %s132
    %p141 = scmp.eq.s32.totalorder %s16, 1
    %p142 = por %p140, %p141
    %p143 = scmp.ne.s32.totalorder %s132, %s133
    %p144 = scmp.eq.s32.totalorder %s16, 0
    %p145 = por %p143, %p144
    %p146 = scmp.ne.s32.totalorder %s132, %s133
    %p147 = scmp.eq.s32.totalorder %s17, 1
    %p148 = por %p146, %p147
    %p150 = scmp.ne.s32.totalorder %s133, %s149
    %p151 = scmp.eq.s32.totalorder %s17, 0
    %p152 = por %p150, %p151
    %p153 = scmp.le.s32.totalorder 1, %s11
    %p154 = scmp.lt.s32.totalorder %s11, 3
    %p155 = pnand %p153, %p154
    %p156 = pneg %p155
    // Predicated region
    $region9: #{pixel_discriminator.2} parent=5 // pred_check
      _
    $region10: #{pixel_discriminator.2} parent=5 // pred_check_branch
      %158 = sbr.rel (%p155) target = $region12
    $region11: #{pixel_discriminator.2} parent=5 // pred_region
      %s159 = ssub.s32 %s11, 1
      // Predicated region
      $region13: #{pixel_discriminator.2} parent=11 // pred_check
        %p160 = pneg %p72
      $region14: #{pixel_discriminator.2} parent=11 // pred_check_branch
        %162 = sbr.rel (%p160) target = $region16
      $region15: #{pixel_discriminator.2} parent=11 // pred_region
        _
      $region16: #{pixel_discriminator.2} parent=11 // pred_fallthru
        _
      // Predicated region
      $region17: #{pixel_discriminator.2} parent=11 // pred_check
        %p163 = pneg %p93
      $region18: #{pixel_discriminator.2} parent=11 // pred_check_branch
        %165 = sbr.rel (%p163) target = $region20
      $region19: #{pixel_discriminator.2} parent=11 // pred_region
        _
      $region20: #{pixel_discriminator.2} parent=11 // pred_fallthru
        _
    $region12: #{pixel_discriminator.2} parent=5 // pred_fallthru
      _
    %p166 = scmp.lt.s32.totalorder %s11, 2
    // Predicated region
    $region21: #{pixel_discriminator.2} parent=5 // pred_check
      %p167 = pneg %p166
    $region22: #{pixel_discriminator.2} parent=5 // pred_check_branch
      %169 = sbr.rel (%p167) target = $region24
    $region23: #{pixel_discriminator.2} parent=5 // pred_region
      // Predicated region
      $region25: #{pixel_discriminator.2} parent=23 // pred_check
        %p170 = pneg %p45
      $region26: #{pixel_discriminator.2} parent=23 // pred_check_branch
        %172 = sbr.rel (%p170) target = $region28
      $region27: #{pixel_discriminator.2} parent=23 // pred_region
        %s173 = smul.u32 2, %s19
        %p174 = scmp.lt.s32.totalorder %s18, 1
        %s175 = scalar_select %p174, %s18, 1
        %p176 = scmp.lt.s32.totalorder %s173, 1
        %s177 = scalar_select %p176, %s173, 1
        %s178 = smul.addr %s175, 2
        %s179 = sadd.s32 %s177, %s178
        %s180 = smul.addr %s179, 2
        %s181 = scalar_lea.vmem %s0, %s180
        %s182 = smul.u32 2, %s19
      $region28: #{pixel_discriminator.2} parent=23 // pred_fallthru
        _
    $region24: #{pixel_discriminator.2} parent=5 // pred_fallthru
      _
    %p183 = scmp.le.s32.totalorder 1, %s11
    %p184 = scmp.lt.s32.totalorder %s11, 3
    %p185 = pnand %p183, %p184
    %p186 = pneg %p185
    // Predicated region
    $region29: #{pixel_discriminator.2} parent=5 // pred_check
      _
    $region30: #{pixel_discriminator.2} parent=5 // pred_check_branch
      %188 = sbr.rel (%p185) target = $region32
    $region31: #{pixel_discriminator.2} parent=5 // pred_region
      %s189 = ssub.s32 %s11, 1
      %s190 = smul.u32 2, %s21
      %p191 = scmp.lt.s32.totalorder %s20, 1
      %s192 = scalar_select %p191, %s20, 1
      %p193 = scmp.lt.s32.totalorder %s190, 1
      %s194 = scalar_select %p193, %s190, 1
      %s195 = smul.addr %s192, 2
      %s196 = sadd.s32 %s194, %s195
      %s197 = smul.addr %s196, 2
      %s198 = scalar_lea.vmem %s0, %s197
      %p199 = pneg %p51
      %p200 = pneg %p48
      %p201 = pneg %p72
      %p202 = pneg %p69
      %p203 = pneg %p93
      %p204 = pneg %p90
      %p205 = pneg %p119
      %p206 = pneg %p116
      %p207 = scmp.lt.s32.totalorder %s20, 1
      %s208 = scalar_select %p207, %s20, 1
      %s209 = smul.addr %s208, 8
      %s210 = smul.addr %s209, 8
      %s211 = scalar_lea.vmem %s3, %s210
      %p212 = pneg %p145
      %p213 = pneg %p142
      %p214 = scmp.lt.s32.totalorder %s20, 1
      %s215 = scalar_select %p214, %s20, 1
      %s216 = smul.addr %s215, 8
      %s217 = smul.addr %s216, 8
      %s218 = scalar_lea.vmem %s4, %s217
      %s219 = smul.u32 2, %s21
      %p220 = scmp.lt.s32.totalorder %s20, 1
      %s221 = scalar_select %p220, %s20, 1
      %p222 = scmp.lt.s32.totalorder %s219, 1
      %s223 = scalar_select %p222, %s219, 1
      %s224 = smul.addr %s221, 2
      %s225 = sadd.s32 %s223, %s224
      %s226 = smul.addr %s225, 2
      %s227 = scalar_lea.vmem %s0, %s226
      %s228 = smul.u32 2, %s21
      %p229 = scmp.lt.s32.totalorder %s20, 1
      %s230 = scalar_select %p229, %s20, 1
      %s231 = smul.addr %s230, 8
      %s232 = smul.addr %s231, 8
      %s233 = scalar_lea.vmem %s3, %s232
      %p234 = scmp.lt.s32.totalorder %s20, 1
      %s235 = scalar_select %p234, %s20, 1
      %s236 = smul.addr %s235, 8
      %s237 = smul.addr %s236, 8
      %s238 = scalar_lea.vmem %s4, %s237
      %p240 = scmp.eq.s32.totalorder %s21, 0
      // Predicated region
      $region33: #{pixel_discriminator.2} parent=31 // pred_check
        %p241 = pneg %p240
      $region34: #{pixel_discriminator.2} parent=31 // pred_check_branch
        %243 = sbr.rel (%p241) target = $region36
      $region35: #{pixel_discriminator.2} parent=31 // pred_region
        %vm244 = vcmask 7168
        %245 = vst.msk [vmem:[%s233] sm:$0xff] %vm244, 0.0
        %246 = vst.msk [vmem:[%s233 + $0x8] sm:$0xff] %vm244, 0.0
        %247 = vst.msk [vmem:[%s233 + $0x10] sm:$0xff] %vm244, 0.0
        %248 = vst.msk [vmem:[%s233 + $0x18] sm:$0xff] %vm244, 0.0
        %249 = vst.msk [vmem:[%s233 + $0x20] sm:$0xff] %vm244, 0.0
        %250 = vst.msk [vmem:[%s233 + $0x28] sm:$0xff] %vm244, 0.0
        %251 = vst.msk [vmem:[%s233 + $0x30] sm:$0xff] %vm244, 0.0
        %252 = vst.msk [vmem:[%s233 + $0x38] sm:$0xff] %vm244, 0.0
        %vm253 = vcmask 523264
        %254 = vst.msk [vmem:[%s238] sm:$0xff] %vm253, 0.0
        %255 = vst.msk [vmem:[%s238 + $0x8] sm:$0xff] %vm253, 0.0
        %256 = vst.msk [vmem:[%s238 + $0x10] sm:$0xff] %vm253, 0.0
        %257 = vst.msk [vmem:[%s238 + $0x18] sm:$0xff] %vm253, 0.0
        %258 = vst.msk [vmem:[%s238 + $0x20] sm:$0xff] %vm253, 0.0
        %259 = vst.msk [vmem:[%s238 + $0x28] sm:$0xff] %vm253, 0.0
        %260 = vst.msk [vmem:[%s238 + $0x30] sm:$0xff] %vm253, 0.0
        %261 = vst.msk [vmem:[%s238 + $0x38] sm:$0xff] %vm253, 0.0
      $region36: #{pixel_discriminator.2} parent=31 // pred_fallthru
        _
      %v262 = vld [vmem:[%s1] sm:$0xf]
      %v263 = vld [vmem:[%s1 + $0x4] sm:$0xf]
      %v264 = vld [vmem:[%s1 + $0x8] sm:$0xf]
      %v265 = vld [vmem:[%s1 + $0xc] sm:$0xf]
      %v266 = vld [vmem:[%s1 + $0x10] sm:$0xf]
      %v267 = vld [vmem:[%s1 + $0x14] sm:$0xf]
      %v268 = vld [vmem:[%s1 + $0x18] sm:$0xf]
      %v269 = vld [vmem:[%s1 + $0x1c] sm:$0xf]
      %v270 = vld [vmem:[%s227] sm:$0xf]
      %v271 = vld [vmem:[%s2] sm:$0xff]
      %v272 = vld [vmem:[%s2 + $0x8] sm:$0xff]
      %v273 = vld [vmem:[%s2 + $0x10] sm:$0xff]
      %v274 = vld [vmem:[%s2 + $0x18] sm:$0xff]
      %v275 = vld [vmem:[%s2 + $0x20] sm:$0xff]
      %v276 = vld [vmem:[%s2 + $0x28] sm:$0xff]
      %v277 = vld [vmem:[%s2 + $0x30] sm:$0xff]
      %v278 = vld [vmem:[%s2 + $0x38] sm:$0xff]
      %280 = vset.pattern.permute.xlu0 0
      %281 = vperm.xlu0 %280, %v271
      %v282 = vpop.permute.xlu0 %281
      %285 = vset.pattern.permute.xlu0 0
      %286 = vperm.xlu0 %285, %v272
      %v287 = vpop.permute.xlu0 %286
      %290 = vset.pattern.permute.xlu0 0
      %291 = vperm.xlu0 %290, %v273
      %v292 = vpop.permute.xlu0 %291
      %295 = vset.pattern.permute.xlu0 0
      %296 = vperm.xlu0 %295, %v274
      %v297 = vpop.permute.xlu0 %296
      %300 = vset.pattern.permute.xlu0 0
      %301 = vperm.xlu0 %300, %v275
      %v302 = vpop.permute.xlu0 %301
      %305 = vset.pattern.permute.xlu0 0
      %306 = vperm.xlu0 %305, %v276
      %v307 = vpop.permute.xlu0 %306
      %310 = vset.pattern.permute.xlu0 0
      %311 = vperm.xlu0 %310, %v277
      %v312 = vpop.permute.xlu0 %311
      %315 = vset.pattern.permute.xlu0 0
      %316 = vperm.xlu0 %315, %v278
      %v317 = vpop.permute.xlu0 %316
      %v327 = vunpack.c.l.b16 %v262
      %v328 = vunpack.c.l.b16 %v263
      %v329 = vunpack.c.l.b16 %v264
      %v330 = vunpack.c.l.b16 %v265
      %v331 = vunpack.c.l.b16 %v266
      %v332 = vunpack.c.l.b16 %v267
      %v333 = vunpack.c.l.b16 %v268
      %v334 = vunpack.c.l.b16 %v269
      %v335 = vpack.c.b16 %v328, %v327
      %v336 = vpack.c.b16 %v330, %v329
      %v337 = vpack.c.b16 %v332, %v331
      %v338 = vpack.c.b16 %v334, %v333
      %v341 = vunpack.c.l.s4 1983009808
      %v342 = vunpack.c.0.s8 %v341
      %v343 = vlaneseq
      %v344 = vshrl.u32 %v343, 7
      %v345 = vsub.s32 %v342, %v344
      %v346 = vrot.slane %v270, %v345
      %v347 = vcombine.high %v346, %v346
      %vm348 = vcmask 31744
      %v350 = vsel %vm348, %v335, 0
      %v353 = vsel %vm348, %v336, 0
      %v356 = vsel %vm348, %v337, 0
      %v359 = vsel %vm348, %v338, 0
      %vm361 = vcmask 1041408
      %v363 = vsel %vm361, %v346, 0
      %v366 = vsel %vm361, %v347, 0
      %368 = vmatprep.subr.bf16.mxu0 0
      %369 = vmatpush1.bf16.msra.mxu0 0
      %370 = vmatprep.subr.bf16.mxu0 0
      %371 = vmatpush1.bf16.msra.mxu0 0
      %372 = vmatprep.subr.bf16.mxu0 0
      %373 = vmatpush1.bf16.msra.mxu0 0
      %374 = vmatprep.subr.bf16.mxu0 0
      %375 = vmatpush1.bf16.msra.mxu0 0
      %376 = vmatprep.subr.bf16.mxu0 0
      %377 = vmatpush1.bf16.msra.mxu0 0
      %378 = vmatprep.subr.bf16.mxu0 0
      %379 = vmatpush1.bf16.msra.mxu0 0
      %380 = vmatprep.subr.bf16.mxu0 0
      %381 = vmatpush1.bf16.msra.mxu0 0
      %382 = vmatprep.subr.bf16.mxu0 %v366
      %383 = vmatpush1.bf16.msra.mxu0 %v363
      %384 = vmatprep.subr.bf16.mxu0 0
      %385 = vmatpush2.bf16.msra.mxu0 0
      %386 = vmatprep.subr.bf16.mxu0 0
      %387 = vmatpush2.bf16.msra.mxu0 0
      %388 = vmatprep.subr.bf16.mxu0 0
      %389 = vmatpush2.bf16.msra.mxu0 0
      %390 = vmatprep.subr.bf16.mxu0 0
      %391 = vmatpush2.bf16.msra.mxu0 0
      %392 = vmatprep.subr.bf16.mxu0 0
      %393 = vmatpush2.bf16.msra.mxu0 0
      %394 = vmatprep.subr.bf16.mxu0 0
      %395 = vmatpush2.bf16.msra.mxu0 0
      %396 = vmatprep.subr.bf16.mxu0 0
      %397 = vmatpush2.bf16.msra.mxu0 0
      %398 = vmatprep.subr.bf16.mxu0 0
      %399 = vmatpush2.bf16.msra.mxu0 0
      %400 = vmatprep.mubr.bf16.mxu0 0
      %401 = vmatmul.mubr.bf16.gmra.mxu0 %v350
      %v402 = vpop.f32.mrf.mxu0
      %v403 = vadd.f32 %v282, %v402
      %v404 = vpop.f32.mrf.mxu0
      %v405 = vadd.f32 %v282, %v404
      %v406 = vpop.f32.mrf.mxu0
      %v407 = vadd.f32 %v287, %v406
      %v408 = vpop.f32.mrf.mxu0
      %v409 = vadd.f32 %v287, %v408
      %410 = vmatprep.mubr.bf16.mxu0 0
      %411 = vmatmul.mubr.bf16.gmra.mxu0 %v353
      %v412 = vpop.f32.mrf.mxu0
      %v413 = vadd.f32 %v292, %v412
      %v414 = vpop.f32.mrf.mxu0
      %v415 = vadd.f32 %v292, %v414
      %v416 = vpop.f32.mrf.mxu0
      %v417 = vadd.f32 %v297, %v416
      %v418 = vpop.f32.mrf.mxu0
      %v419 = vadd.f32 %v297, %v418
      %420 = vmatprep.mubr.bf16.mxu0 0
      %421 = vmatmul.mubr.bf16.gmra.mxu0 %v356
      %v422 = vpop.f32.mrf.mxu0
      %v423 = vadd.f32 %v302, %v422
      %v424 = vpop.f32.mrf.mxu0
      %v425 = vadd.f32 %v302, %v424
      %v426 = vpop.f32.mrf.mxu0
      %v427 = vadd.f32 %v307, %v426
      %v428 = vpop.f32.mrf.mxu0
      %v429 = vadd.f32 %v307, %v428
      %430 = vmatprep.mubr.bf16.mxu0 0
      %431 = vmatmul.mubr.bf16.gmra.mxu0 %v359
      %v432 = vpop.f32.mrf.mxu0
      %v433 = vadd.f32 %v312, %v432
      %v434 = vpop.f32.mrf.mxu0
      %v435 = vadd.f32 %v312, %v434
      %v436 = vpop.f32.mrf.mxu0
      %v437 = vadd.f32 %v317, %v436
      %v438 = vpop.f32.mrf.mxu0
      %v439 = vadd.f32 %v317, %v438
      %440 = vdwg.mxu0
      %vm441 = vcmp.ge.f32.partialorder %v403, 0.0
      %vm442 = vcmp.ge.f32.partialorder %v405, 0.0
      %vm443 = vcmp.ge.f32.partialorder %v407, 0.0
      %vm444 = vcmp.ge.f32.partialorder %v409, 0.0
      %vm445 = vcmp.ge.f32.partialorder %v413, 0.0
      %vm446 = vcmp.ge.f32.partialorder %v415, 0.0
      %vm447 = vcmp.ge.f32.partialorder %v417, 0.0
      %vm448 = vcmp.ge.f32.partialorder %v419, 0.0
      %vm449 = vcmp.ge.f32.partialorder %v423, 0.0
      %vm450 = vcmp.ge.f32.partialorder %v425, 0.0
      %vm451 = vcmp.ge.f32.partialorder %v427, 0.0
      %vm452 = vcmp.ge.f32.partialorder %v429, 0.0
      %vm453 = vcmp.ge.f32.partialorder %v433, 0.0
      %vm454 = vcmp.ge.f32.partialorder %v435, 0.0
      %vm455 = vcmp.ge.f32.partialorder %v437, 0.0
      %vm456 = vcmp.ge.f32.partialorder %v439, 0.0
      %v457 = vmul.f32 %v403, 0.2
      %v458 = vmul.f32 %v405, 0.2
      %v459 = vmul.f32 %v407, 0.2
      %v460 = vmul.f32 %v409, 0.2
      %v461 = vmul.f32 %v413, 0.2
      %v462 = vmul.f32 %v415, 0.2
      %v463 = vmul.f32 %v417, 0.2
      %v464 = vmul.f32 %v419, 0.2
      %v465 = vmul.f32 %v423, 0.2
      %v466 = vmul.f32 %v425, 0.2
      %v467 = vmul.f32 %v427, 0.2
      %v468 = vmul.f32 %v429, 0.2
      %v469 = vmul.f32 %v433, 0.2
      %v470 = vmul.f32 %v435, 0.2
      %v471 = vmul.f32 %v437, 0.2
      %v472 = vmul.f32 %v439, 0.2
      %v473 = vsel %vm441, %v403, %v457
      %v474 = vsel %vm442, %v405, %v458
      %v475 = vsel %vm443, %v407, %v459
      %v476 = vsel %vm444, %v409, %v460
      %v477 = vsel %vm445, %v413, %v461
      %v478 = vsel %vm446, %v415, %v462
      %v479 = vsel %vm447, %v417, %v463
      %v480 = vsel %vm448, %v419, %v464
      %v481 = vsel %vm449, %v423, %v465
      %v482 = vsel %vm450, %v425, %v466
      %v483 = vsel %vm451, %v427, %v467
      %v484 = vsel %vm452, %v429, %v468
      %v485 = vsel %vm453, %v433, %v469
      %v486 = vsel %vm454, %v435, %v470
      %v487 = vsel %vm455, %v437, %v471
      %v488 = vsel %vm456, %v439, %v472
      %v489 = vld [vmem:[%s233] sm:$0xff]
      %v490 = vld [vmem:[%s233 + $0x8] sm:$0xff]
      %v491 = vld [vmem:[%s233 + $0x10] sm:$0xff]
      %v492 = vld [vmem:[%s233 + $0x18] sm:$0xff]
      %v493 = vld [vmem:[%s233 + $0x20] sm:$0xff]
      %v494 = vld [vmem:[%s233 + $0x28] sm:$0xff]
      %v495 = vld [vmem:[%s233 + $0x30] sm:$0xff]
      %v496 = vld [vmem:[%s233 + $0x38] sm:$0xff]
      %v497 = vadd.f32 %v473, %v474
      %498 = vadd.xlane.f32.xlu0 %v497
      %v499 = vpop.xlane.xlu0 %498
      %v500 = vadd.f32 %v475, %v476
      %501 = vadd.xlane.f32.xlu0 %v500
      %v502 = vpop.xlane.xlu0 %501
      %v503 = vadd.f32 %v477, %v478
      %504 = vadd.xlane.f32.xlu0 %v503
      %v505 = vpop.xlane.xlu0 %504
      %v506 = vadd.f32 %v479, %v480
      %507 = vadd.xlane.f32.xlu0 %v506
      %v508 = vpop.xlane.xlu0 %507
      %v509 = vadd.f32 %v481, %v482
      %510 = vadd.xlane.f32.xlu0 %v509
      %v511 = vpop.xlane.xlu0 %510
      %v512 = vadd.f32 %v483, %v484
      %513 = vadd.xlane.f32.xlu0 %v512
      %v514 = vpop.xlane.xlu0 %513
      %v515 = vadd.f32 %v485, %v486
      %516 = vadd.xlane.f32.xlu0 %v515
      %v517 = vpop.xlane.xlu0 %516
      %v518 = vadd.f32 %v487, %v488
      %519 = vadd.xlane.f32.xlu0 %v518
      %v520 = vpop.xlane.xlu0 %519
      %v521 = vadd.f32 %v489, %v499
      %v522 = vadd.f32 %v490, %v502
      %v523 = vadd.f32 %v491, %v505
      %v524 = vadd.f32 %v492, %v508
      %v525 = vadd.f32 %v493, %v511
      %v526 = vadd.f32 %v494, %v514
      %v527 = vadd.f32 %v495, %v517
      %v528 = vadd.f32 %v496, %v520
      %vm529 = vcmask 7168
      %530 = vst.msk [vmem:[%s233] sm:$0xff] %vm529, %v521
      %531 = vst.msk [vmem:[%s233 + $0x8] sm:$0xff] %vm529, %v522
      %532 = vst.msk [vmem:[%s233 + $0x10] sm:$0xff] %vm529, %v523
      %533 = vst.msk [vmem:[%s233 + $0x18] sm:$0xff] %vm529, %v524
      %534 = vst.msk [vmem:[%s233 + $0x20] sm:$0xff] %vm529, %v525
      %535 = vst.msk [vmem:[%s233 + $0x28] sm:$0xff] %vm529, %v526
      %536 = vst.msk [vmem:[%s233 + $0x30] sm:$0xff] %vm529, %v527
      %537 = vst.msk [vmem:[%s233 + $0x38] sm:$0xff] %vm529, %v528
      %v538 = vld [vmem:[%s238] sm:$0xff]
      %v539 = vld [vmem:[%s238 + $0x8] sm:$0xff]
      %v540 = vld [vmem:[%s238 + $0x10] sm:$0xff]
      %v541 = vld [vmem:[%s238 + $0x18] sm:$0xff]
      %v542 = vld [vmem:[%s238 + $0x20] sm:$0xff]
      %v543 = vld [vmem:[%s238 + $0x28] sm:$0xff]
      %v544 = vld [vmem:[%s238 + $0x30] sm:$0xff]
      %v545 = vld [vmem:[%s238 + $0x38] sm:$0xff]
      %546 = vmatprep.subr.mxu0 0.0
      %547 = vmatpush1.xpose.msra.mxu0 0.0
      %548 = vmatprep.subr.mxu0 0.0
      %549 = vmatpush1.xpose.msra.mxu0 0.0
      %550 = vmatprep.subr.mxu0 0.0
      %551 = vmatpush1.xpose.msra.mxu0 0.0
      %552 = vmatprep.subr.mxu0 0.0
      %553 = vmatpush1.xpose.msra.mxu0 0.0
      %554 = vmatprep.subr.mxu0 0.0
      %555 = vmatpush1.xpose.msra.mxu0 0.0
      %556 = vmatprep.subr.mxu0 0.0
      %557 = vmatpush1.xpose.msra.mxu0 0.0
      %558 = vmatprep.subr.mxu0 0.0
      %559 = vmatpush1.xpose.msra.mxu0 0.0
      %560 = vmatprep.subr.mxu0 0.0
      %561 = vmatpush1.xpose.msra.mxu0 0.0
      %562 = vmatprep.subr.mxu0 %v488
      %563 = vmatpush1.xpose.msra.mxu0 %v487
      %564 = vmatprep.subr.mxu0 %v486
      %565 = vmatpush1.xpose.msra.mxu0 %v485
      %566 = vmatprep.subr.mxu0 %v484
      %567 = vmatpush1.xpose.msra.mxu0 %v483
      %568 = vmatprep.subr.mxu0 %v482
      %569 = vmatpush1.xpose.msra.mxu0 %v481
      %570 = vmatprep.subr.mxu0 %v480
      %571 = vmatpush1.xpose.msra.mxu0 %v479
      %572 = vmatprep.subr.mxu0 %v478
      %573 = vmatpush1.xpose.msra.mxu0 %v477
      %574 = vmatprep.subr.mxu0 %v476
      %575 = vmatpush1.xpose.msra.mxu0 %v475
      %576 = vmatprep.subr.mxu0 %v474
      %577 = vmatpush1.xpose.msra.mxu0 %v473
      %578 = vmatprep.subr.mxu0 0.0
      %579 = vmatpush2.xpose.msra.mxu0 0.0
      %580 = vmatprep.subr.mxu0 0.0
      %581 = vmatpush2.xpose.msra.mxu0 0.0
      %582 = vmatprep.subr.mxu0 0.0
      %583 = vmatpush2.xpose.msra.mxu0 0.0
      %584 = vmatprep.subr.mxu0 0.0
      %585 = vmatpush2.xpose.msra.mxu0 0.0
      %586 = vmatprep.subr.mxu0 0.0
      %587 = vmatpush2.xpose.msra.mxu0 0.0
      %588 = vmatprep.subr.mxu0 0.0
      %589 = vmatpush2.xpose.msra.mxu0 0.0
      %590 = vmatprep.subr.mxu0 0.0
      %591 = vmatpush2.xpose.msra.mxu0 0.0
      %592 = vmatprep.subr.mxu0 0.0
      %593 = vmatpush2.xpose.msra.mxu0 0.0
      %594 = vmatprep.subr.mxu0 0.0
      %595 = vmatpush2.xpose.msra.mxu0 0.0
      %596 = vmatprep.subr.mxu0 0.0
      %597 = vmatpush2.xpose.msra.mxu0 0.0
      %598 = vmatprep.subr.mxu0 0.0
      %599 = vmatpush2.xpose.msra.mxu0 0.0
      %600 = vmatprep.subr.mxu0 0.0
      %601 = vmatpush2.xpose.msra.mxu0 0.0
      %602 = vmatprep.subr.mxu0 0.0
      %603 = vmatpush2.xpose.msra.mxu0 0.0
      %604 = vmatprep.subr.mxu0 0.0
      %605 = vmatpush2.xpose.msra.mxu0 0.0
      %606 = vmatprep.subr.mxu0 0.0
      %607 = vmatpush2.xpose.msra.mxu0 0.0
      %608 = vmatprep.subr.mxu0 0.0
      %609 = vmatpush2.xpose.msra.mxu0 0.0
      %610 = vmatprep.mubr.f32.mxu0 %v474
      %611 = vmatmul.mubr.f32.gmra.mxu0 %v473
      %v612 = vpop.f32.mrf.mxu0
      %v613 = vadd.f32 0.0, %v612
      %v614 = vpop.f32.mrf.mxu0
      %615 = vmatprep.mubr.f32.mxu0 %v476
      %616 = vmatmul.mubr.f32.gmra.mxu0 %v475
      %v617 = vpop.f32.mrf.mxu0
      %v618 = vadd.f32 0.0, %v617
      %v619 = vpop.f32.mrf.mxu0
      %620 = vmatprep.mubr.f32.mxu0 %v478
      %621 = vmatmul.mubr.f32.gmra.mxu0 %v477
      %v622 = vpop.f32.mrf.mxu0
      %v623 = vadd.f32 0.0, %v622
      %v624 = vpop.f32.mrf.mxu0
      %625 = vmatprep.mubr.f32.mxu0 %v480
      %626 = vmatmul.mubr.f32.gmra.mxu0 %v479
      %v627 = vpop.f32.mrf.mxu0
      %v628 = vadd.f32 0.0, %v627
      %v629 = vpop.f32.mrf.mxu0
      %630 = vmatprep.mubr.f32.mxu0 %v482
      %631 = vmatmul.mubr.f32.gmra.mxu0 %v481
      %v632 = vpop.f32.mrf.mxu0
      %v633 = vadd.f32 0.0, %v632
      %v634 = vpop.f32.mrf.mxu0
      %635 = vmatprep.mubr.f32.mxu0 %v484
      %636 = vmatmul.mubr.f32.gmra.mxu0 %v483
      %v637 = vpop.f32.mrf.mxu0
      %v638 = vadd.f32 0.0, %v637
      %v639 = vpop.f32.mrf.mxu0
      %640 = vmatprep.mubr.f32.mxu0 %v486
      %641 = vmatmul.mubr.f32.gmra.mxu0 %v485
      %v642 = vpop.f32.mrf.mxu0
      %v643 = vadd.f32 0.0, %v642
      %v644 = vpop.f32.mrf.mxu0
      %645 = vmatprep.mubr.f32.mxu0 %v488
      %646 = vmatmul.mubr.f32.gmra.mxu0 %v487
      %v647 = vpop.f32.mrf.mxu0
      %v648 = vadd.f32 0.0, %v647
      %v649 = vpop.f32.mrf.mxu0
      %650 = vdwg.mxu0
      %v651 = vadd.f32 %v538, %v613
      %v652 = vadd.f32 %v539, %v618
      %v653 = vadd.f32 %v540, %v623
      %v654 = vadd.f32 %v541, %v628
      %v655 = vadd.f32 %v542, %v633
      %v656 = vadd.f32 %v543, %v638
      %v657 = vadd.f32 %v544, %v643
      %v658 = vadd.f32 %v545, %v648
      %vm659 = vcmask 523264
      %660 = vst.msk [vmem:[%s238] sm:$0xff] %vm659, %v651
      %661 = vst.msk [vmem:[%s238 + $0x8] sm:$0xff] %vm659, %v652
      %662 = vst.msk [vmem:[%s238 + $0x10] sm:$0xff] %vm659, %v653
      %663 = vst.msk [vmem:[%s238 + $0x18] sm:$0xff] %vm659, %v654
      %664 = vst.msk [vmem:[%s238 + $0x20] sm:$0xff] %vm659, %v655
      %665 = vst.msk [vmem:[%s238 + $0x28] sm:$0xff] %vm659, %v656
      %666 = vst.msk [vmem:[%s238 + $0x30] sm:$0xff] %vm659, %v657
      %667 = vst.msk [vmem:[%s238 + $0x38] sm:$0xff] %vm659, %v658
      %p668 = scmp.lt.s32.totalorder %s20, 1
      %s669 = scalar_select %p668, %s20, 1
      %s670 = smul.addr %s669, 8
      %s671 = smul.addr %s670, 8
      %s672 = scalar_lea.vmem %s3, %s671
      %p673 = scmp.lt.s32.totalorder %s20, 1
      %s674 = scalar_select %p673, %s20, 1
      %s675 = smul.addr %s674, 8
      %s676 = smul.addr %s675, 8
      %s677 = scalar_lea.vmem %s4, %s676
      // Predicated region
      $region37: #{pixel_discriminator.2} parent=31 // pred_check
        %p678 = pneg %p116
      $region38: #{pixel_discriminator.2} parent=31 // pred_check_branch
        %680 = sbr.rel (%p678) target = $region40
      $region39: #{pixel_discriminator.2} parent=31 // pred_region
        _
      $region40: #{pixel_discriminator.2} parent=31 // pred_fallthru
        _
      // Predicated region
      $region41: #{pixel_discriminator.2} parent=31 // pred_check
        %p681 = pneg %p142
      $region42: #{pixel_discriminator.2} parent=31 // pred_check_branch
        %683 = sbr.rel (%p681) target = $region44
      $region43: #{pixel_discriminator.2} parent=31 // pred_region
        _
      $region44: #{pixel_discriminator.2} parent=31 // pred_fallthru
        _
    $region32: #{pixel_discriminator.2} parent=5 // pred_fallthru
      _
    %p684 = scmp.le.s32.totalorder 2, %s11
    // Predicated region
    $region45: #{pixel_discriminator.2} parent=5 // pred_check
      %p685 = pneg %p684
    $region46: #{pixel_discriminator.2} parent=5 // pred_check_branch
      %687 = sbr.rel (%p685) target = $region48
    $region47: #{pixel_discriminator.2} parent=5 // pred_region
      %s688 = ssub.s32 %s11, 2
      // Predicated region
      $region49: #{pixel_discriminator.2} parent=47 // pred_check
        %p689 = pneg %p122
      $region50: #{pixel_discriminator.2} parent=47 // pred_check_branch
        %691 = sbr.rel (%p689) target = $region52
      $region51: #{pixel_discriminator.2} parent=47 // pred_region
        %p692 = scmp.lt.s32.totalorder %s22, 1
        %s693 = scalar_select %p692, %s22, 1
        %s694 = smul.addr %s693, 8
        %s695 = smul.addr %s694, 8
        %s696 = scalar_lea.vmem %s3, %s695
      $region52: #{pixel_discriminator.2} parent=47 // pred_fallthru
        _
      // Predicated region
      $region53: #{pixel_discriminator.2} parent=47 // pred_check
        %p697 = pneg %p148
      $region54: #{pixel_discriminator.2} parent=47 // pred_check_branch
        %699 = sbr.rel (%p697) target = $region56
      $region55: #{pixel_discriminator.2} parent=47 // pred_region
        %p700 = scmp.lt.s32.totalorder %s22, 1
        %s701 = scalar_select %p700, %s22, 1
        %s702 = smul.addr %s701, 8
        %s703 = smul.addr %s702, 8
        %s704 = scalar_lea.vmem %s4, %s703
      $region56: #{pixel_discriminator.2} parent=47 // pred_fallthru
        _
    $region48: #{pixel_discriminator.2} parent=5 // pred_fallthru
      _
  $region6: #{pixel_discriminator.2} parent=0 // loop_footer
    %s15 = sadd.s32 1, %s11
  $region7: #{pixel_discriminator.2} parent=0 // loop_footer_branch
    %10 = sbr.rel target = $region3
  $region8: #{pixel_discriminator.2} parent=0 // loop_exit
    _

// kernel: pixel_discriminator.3
$region0: #{pixel_discriminator.3}
  #allocation0 [shape = 'u32[]', space=smem, size = 0x4, offset = 0x4, fixed_abs, tag = 'smem constant byte address 0x4 - core index']
  #allocation1 [shape = 'u32[144,128]{1,0:T(1,128)}', space=vmem, size = 0x12000, scoped, tag = 'internal scratch']
  %s0 = inlined_call_operand.vmem [shape: bf16[2,4,256], index: 0, kind: input, shape index: {}]
  %s1 = inlined_call_operand.vmem [shape: bf16[64,4], index: 1, kind: input, shape index: {}]
  %s2 = inlined_call_operand.vmem [shape: f32[64,1], index: 2, kind: input, shape index: {}]
  %s3 = inlined_call_operand.vmem [shape: bf16[128,64], index: 3, kind: input, shape index: {}]
  %s4 = inlined_call_operand.vmem [shape: f32[128,1], index: 4, kind: input, shape index: {}]
  %s5 = inlined_call_operand.vmem [shape: f32[128,1], index: 5, kind: input, shape index: {}]
  %s6 = inlined_call_operand.vmem [shape: f32[1,128], index: 6, kind: input, shape index: {}]
  %s7 = inlined_call_operand.vmem [shape: f32[2,1,256], index: 7, kind: output, shape index: {}]
  %s8 = sld [smem:[#allocation0]]
  $region61: #{pixel_discriminator.3} parent=0
    _
  %s10 = ssub.s32 1, %s8
  %s11 = scalar_select 0, %s10, %s8
  loop: start=0, step=1, limit=4
  $region2: #{pixel_discriminator.3} parent=0 // loop_pre_header
    _
  $region3: #{pixel_discriminator.3} parent=0 // loop_header
    %s13 = sphi 0, %s17
    %p14 = scmp.ge.s32.totalorder %s13, 4
    %s20 = sphi 0, %s32
    %s21 = sphi 0, %s28
    %s22 = sphi 0, %s20
    %s23 = sphi 0, %s21
    %s24 = sphi 0, %s22
    %s25 = sphi 0, %s23
    %s37 = sphi 0, %s39
    %s40 = sphi 0, %s37
    %s41 = sphi 0, %s40
    %s57 = sphi 0, %s41
    %s61 = sphi 0, %s61
    %s63 = sphi 0, %s61
    %s64 = sphi 0, %s63
    %s78 = sphi 0, %s64
    %s82 = sphi 0, %s82
    %s84 = sphi 0, %s82
    %s85 = sphi 0, %s84
    %s99 = sphi 0, %s85
    %s103 = sphi 0, %s103
    %s105 = sphi 0, %s103
    %s106 = sphi 0, %s105
    %s120 = sphi 0, %s106
    %s124 = sphi 0, %s124
    %s126 = sphi 0, %s124
    %s127 = sphi 0, %s126
    %s141 = sphi 0, %s127
    %s145 = sphi 0, %s145
    %s147 = sphi 0, %s145
    %s148 = sphi 0, %s147
    %s162 = sphi 0, %s148
    %s166 = sphi 0, %s166
    %s168 = sphi 0, %s166
    %s169 = sphi 0, %s168
    %s183 = sphi 0, %s169
    %s191 = sphi 0, %s193
    %s194 = sphi 0, %s191
    %s195 = sphi 0, %s194
    %s211 = sphi 0, %s195
  $region4: #{pixel_discriminator.3} parent=0 // loop_header_branch
    %16 = sbr.rel (%p14) target = $region8
  $region5: #{pixel_discriminator.3} parent=0 // loop_body
    %s18 = ssub.s32 %s13, 1
    %s19 = ssub.s32 %s13, 2
    %s26 = sadd.s32 1, %s21
    %p27 = scmp.ge.s32.totalorder %s26, 1
    %s28 = scalar_select %p27, 0, %s26
    %s29 = sadd.s32 1, %s20
    %s30 = scalar_select %p27, %s29, %s20
    %p31 = scmp.ge.s32.totalorder %s30, 2
    %s32 = scalar_select %p31, 0, %s30
    %s33 = ssub.s32 %s20, %s32
    %s34 = ssub.s32 %s21, %s28
    %s35 = sor.u32 %s33, %s34
    %p36 = scmp.eq.s32.totalorder %s35, 0
    %s38 = sadd.s32 %s37, 1
    %s39 = scalar_select %p36, %s37, %s38
    %p42 = pneg %p36
    %p43 = scmp.eq.s32.totalorder %s13, 1
    %p44 = por %p42, %p43
    %p45 = scmp.ne.s32.totalorder %s37, %s40
    %p46 = scmp.eq.s32.totalorder %s13, 0
    %p47 = por %p45, %p46
    %p48 = scmp.ne.s32.totalorder %s37, %s40
    %p49 = scmp.eq.s32.totalorder %s18, 1
    %p50 = por %p48, %p49
    %p51 = scmp.ne.s32.totalorder %s40, %s41
    %p52 = scmp.eq.s32.totalorder %s18, 0
    %p53 = por %p51, %p52
    %p54 = scmp.ne.s32.totalorder %s40, %s41
    %p55 = scmp.eq.s32.totalorder %s19, 1
    %p56 = por %p54, %p55
    %p58 = scmp.ne.s32.totalorder %s41, %s57
    %p59 = scmp.eq.s32.totalorder %s19, 0
    %p60 = por %p58, %p59
    %s62 = sadd.s32 %s61, 1
    %p65 = scmp.eq.s32.totalorder %s13, 1
    %p66 = scmp.ne.s32.totalorder %s61, %s63
    %p67 = scmp.eq.s32.totalorder %s13, 0
    %p68 = por %p66, %p67
    %p69 = scmp.ne.s32.totalorder %s61, %s63
    %p70 = scmp.eq.s32.totalorder %s18, 1
    %p71 = por %p69, %p70
    %p72 = scmp.ne.s32.totalorder %s63, %s64
    %p73 = scmp.eq.s32.totalorder %s18, 0
    %p74 = por %p72, %p73
    %p75 = scmp.ne.s32.totalorder %s63, %s64
    %p76 = scmp.eq.s32.totalorder %s19, 1
    %p77 = por %p75, %p76
    %p79 = scmp.ne.s32.totalorder %s64, %s78
    %p80 = scmp.eq.s32.totalorder %s19, 0
    %p81 = por %p79, %p80
    %s83 = sadd.s32 %s82, 1
    %p86 = scmp.eq.s32.totalorder %s13, 1
    %p87 = scmp.ne.s32.totalorder %s82, %s84
    %p88 = scmp.eq.s32.totalorder %s13, 0
    %p89 = por %p87, %p88
    %p90 = scmp.ne.s32.totalorder %s82, %s84
    %p91 = scmp.eq.s32.totalorder %s18, 1
    %p92 = por %p90, %p91
    %p93 = scmp.ne.s32.totalorder %s84, %s85
    %p94 = scmp.eq.s32.totalorder %s18, 0
    %p95 = por %p93, %p94
    %p96 = scmp.ne.s32.totalorder %s84, %s85
    %p97 = scmp.eq.s32.totalorder %s19, 1
    %p98 = por %p96, %p97
    %p100 = scmp.ne.s32.totalorder %s85, %s99
    %p101 = scmp.eq.s32.totalorder %s19, 0
    %p102 = por %p100, %p101
    %s104 = sadd.s32 %s103, 1
    %p107 = scmp.eq.s32.totalorder %s13, 1
    %p108 = scmp.ne.s32.totalorder %s103, %s105
    %p109 = scmp.eq.s32.totalorder %s13, 0
    %p110 = por %p108, %p109
    %p111 = scmp.ne.s32.totalorder %s103, %s105
    %p112 = scmp.eq.s32.totalorder %s18, 1
    %p113 = por %p111, %p112
    %p114 = scmp.ne.s32.totalorder %s105, %s106
    %p115 = scmp.eq.s32.totalorder %s18, 0
    %p116 = por %p114, %p115
    %p117 = scmp.ne.s32.totalorder %s105, %s106
    %p118 = scmp.eq.s32.totalorder %s19, 1
    %p119 = por %p117, %p118
    %p121 = scmp.ne.s32.totalorder %s106, %s120
    %p122 = scmp.eq.s32.totalorder %s19, 0
    %p123 = por %p121, %p122
    %s125 = sadd.s32 %s124, 1
    %p128 = scmp.eq.s32.totalorder %s13, 1
    %p129 = scmp.ne.s32.totalorder %s124, %s126
    %p130 = scmp.eq.s32.totalorder %s13, 0
    %p131 = por %p129, %p130
    %p132 = scmp.ne.s32.totalorder %s124, %s126
    %p133 = scmp.eq.s32.totalorder %s18, 1
    %p134 = por %p132, %p133
    %p135 = scmp.ne.s32.totalorder %s126, %s127
    %p136 = scmp.eq.s32.totalorder %s18, 0
    %p137 = por %p135, %p136
    %p138 = scmp.ne.s32.totalorder %s126, %s127
    %p139 = scmp.eq.s32.totalorder %s19, 1
    %p140 = por %p138, %p139
    %p142 = scmp.ne.s32.totalorder %s127, %s141
    %p143 = scmp.eq.s32.totalorder %s19, 0
    %p144 = por %p142, %p143
    %s146 = sadd.s32 %s145, 1
    %p149 = scmp.eq.s32.totalorder %s13, 1
    %p150 = scmp.ne.s32.totalorder %s145, %s147
    %p151 = scmp.eq.s32.totalorder %s13, 0
    %p152 = por %p150, %p151
    %p153 = scmp.ne.s32.totalorder %s145, %s147
    %p154 = scmp.eq.s32.totalorder %s18, 1
    %p155 = por %p153, %p154
    %p156 = scmp.ne.s32.totalorder %s147, %s148
    %p157 = scmp.eq.s32.totalorder %s18, 0
    %p158 = por %p156, %p157
    %p159 = scmp.ne.s32.totalorder %s147, %s148
    %p160 = scmp.eq.s32.totalorder %s19, 1
    %p161 = por %p159, %p160
    %p163 = scmp.ne.s32.totalorder %s148, %s162
    %p164 = scmp.eq.s32.totalorder %s19, 0
    %p165 = por %p163, %p164
    %s167 = sadd.s32 %s166, 1
    %p170 = scmp.eq.s32.totalorder %s13, 1
    %p171 = scmp.ne.s32.totalorder %s166, %s168
    %p172 = scmp.eq.s32.totalorder %s13, 0
    %p173 = por %p171, %p172
    %p174 = scmp.ne.s32.totalorder %s166, %s168
    %p175 = scmp.eq.s32.totalorder %s18, 1
    %p176 = por %p174, %p175
    %p177 = scmp.ne.s32.totalorder %s168, %s169
    %p178 = scmp.eq.s32.totalorder %s18, 0
    %p179 = por %p177, %p178
    %p180 = scmp.ne.s32.totalorder %s168, %s169
    %p181 = scmp.eq.s32.totalorder %s19, 1
    %p182 = por %p180, %p181
    %p184 = scmp.ne.s32.totalorder %s169, %s183
    %p185 = scmp.eq.s32.totalorder %s19, 0
    %p186 = por %p184, %p185
    %s187 = ssub.s32 %s20, %s32
    %s188 = ssub.s32 %s21, %s28
    %s189 = sor.u32 %s187, %s188
    %p190 = scmp.eq.s32.totalorder %s189, 0
    %s192 = sadd.s32 %s191, 1
    %s193 = scalar_select %p190, %s191, %s192
    %p196 = pneg %p190
    %p197 = scmp.eq.s32.totalorder %s13, 1
    %p198 = por %p196, %p197
    %p199 = scmp.ne.s32.totalorder %s191, %s194
    %p200 = scmp.eq.s32.totalorder %s13, 0
    %p201 = por %p199, %p200
    %p202 = scmp.ne.s32.totalorder %s191, %s194
    %p203 = scmp.eq.s32.totalorder %s18, 1
    %p204 = por %p202, %p203
    %p205 = scmp.ne.s32.totalorder %s194, %s195
    %p206 = scmp.eq.s32.totalorder %s18, 0
    %p207 = por %p205, %p206
    %p208 = scmp.ne.s32.totalorder %s194, %s195
    %p209 = scmp.eq.s32.totalorder %s19, 1
    %p210 = por %p208, %p209
    %p212 = scmp.ne.s32.totalorder %s195, %s211
    %p213 = scmp.eq.s32.totalorder %s19, 0
    %p214 = por %p212, %p213
    %p215 = scmp.le.s32.totalorder 1, %s13
    %p216 = scmp.lt.s32.totalorder %s13, 3
    %p217 = pnand %p215, %p216
    %p218 = pneg %p217
    // Predicated region
    $region9: #{pixel_discriminator.3} parent=5 // pred_check
      _
    $region10: #{pixel_discriminator.3} parent=5 // pred_check_branch
      %220 = sbr.rel (%p217) target = $region12
    $region11: #{pixel_discriminator.3} parent=5 // pred_region
      %s221 = ssub.s32 %s13, 1
      // Predicated region
      $region13: #{pixel_discriminator.3} parent=11 // pred_check
        %p222 = pneg %p74
      $region14: #{pixel_discriminator.3} parent=11 // pred_check_branch
        %224 = sbr.rel (%p222) target = $region16
      $region15: #{pixel_discriminator.3} parent=11 // pred_region
        _
      $region16: #{pixel_discriminator.3} parent=11 // pred_fallthru
        _
      // Predicated region
      $region17: #{pixel_discriminator.3} parent=11 // pred_check
        %p225 = pneg %p95
      $region18: #{pixel_discriminator.3} parent=11 // pred_check_branch
        %227 = sbr.rel (%p225) target = $region20
      $region19: #{pixel_discriminator.3} parent=11 // pred_region
        _
      $region20: #{pixel_discriminator.3} parent=11 // pred_fallthru
        _
      // Predicated region
      $region21: #{pixel_discriminator.3} parent=11 // pred_check
        %p228 = pneg %p116
      $region22: #{pixel_discriminator.3} parent=11 // pred_check_branch
        %230 = sbr.rel (%p228) target = $region24
      $region23: #{pixel_discriminator.3} parent=11 // pred_region
        _
      $region24: #{pixel_discriminator.3} parent=11 // pred_fallthru
        _
      // Predicated region
      $region25: #{pixel_discriminator.3} parent=11 // pred_check
        %p231 = pneg %p137
      $region26: #{pixel_discriminator.3} parent=11 // pred_check_branch
        %233 = sbr.rel (%p231) target = $region28
      $region27: #{pixel_discriminator.3} parent=11 // pred_region
        _
      $region28: #{pixel_discriminator.3} parent=11 // pred_fallthru
        _
      // Predicated region
      $region29: #{pixel_discriminator.3} parent=11 // pred_check
        %p234 = pneg %p158
      $region30: #{pixel_discriminator.3} parent=11 // pred_check_branch
        %236 = sbr.rel (%p234) target = $region32
      $region31: #{pixel_discriminator.3} parent=11 // pred_region
        _
      $region32: #{pixel_discriminator.3} parent=11 // pred_fallthru
        _
      // Predicated region
      $region33: #{pixel_discriminator.3} parent=11 // pred_check
        %p237 = pneg %p179
      $region34: #{pixel_discriminator.3} parent=11 // pred_check_branch
        %239 = sbr.rel (%p237) target = $region36
      $region35: #{pixel_discriminator.3} parent=11 // pred_region
        _
      $region36: #{pixel_discriminator.3} parent=11 // pred_fallthru
        _
    $region12: #{pixel_discriminator.3} parent=5 // pred_fallthru
      _
    %p240 = scmp.lt.s32.totalorder %s13, 2
    // Predicated region
    $region37: #{pixel_discriminator.3} parent=5 // pred_check
      %p241 = pneg %p240
    $region38: #{pixel_discriminator.3} parent=5 // pred_check_branch
      %243 = sbr.rel (%p241) target = $region40
    $region39: #{pixel_discriminator.3} parent=5 // pred_region
      // Predicated region
      $region41: #{pixel_discriminator.3} parent=39 // pred_check
        %p244 = pneg %p47
      $region42: #{pixel_discriminator.3} parent=39 // pred_check_branch
        %246 = sbr.rel (%p244) target = $region44
      $region43: #{pixel_discriminator.3} parent=39 // pred_region
        %s247 = smul.u32 2, %s21
        %p248 = scmp.lt.s32.totalorder %s20, 1
        %s249 = scalar_select %p248, %s20, 1
        %p250 = scmp.lt.s32.totalorder %s247, 1
        %s251 = scalar_select %p250, %s247, 1
        %s252 = smul.addr %s249, 2
        %s253 = sadd.s32 %s251, %s252
        %s254 = smul.addr %s253, 2
        %s255 = scalar_lea.vmem %s0, %s254
        %s256 = smul.u32 2, %s21
      $region44: #{pixel_discriminator.3} parent=39 // pred_fallthru
        _
    $region40: #{pixel_discriminator.3} parent=5 // pred_fallthru
      _
    %p257 = scmp.le.s32.totalorder 1, %s13
    %p258 = scmp.lt.s32.totalorder %s13, 3
    %p259 = pnand %p257, %p258
    %p260 = pneg %p259
    // Predicated region
    $region45: #{pixel_discriminator.3} parent=5 // pred_check
      _
    $region46: #{pixel_discriminator.3} parent=5 // pred_check_branch
      %262 = sbr.rel (%p259) target = $region48
    $region47: #{pixel_discriminator.3} parent=5 // pred_region
      %s263 = ssub.s32 %s13, 1
      %s264 = smul.u32 2, %s23
      %p265 = scmp.lt.s32.totalorder %s22, 1
      %s266 = scalar_select %p265, %s22, 1
      %p267 = scmp.lt.s32.totalorder %s264, 1
      %s268 = scalar_select %p267, %s264, 1
      %s269 = smul.addr %s266, 2
      %s270 = sadd.s32 %s268, %s269
      %s271 = smul.addr %s270, 2
      %s272 = scalar_lea.vmem %s0, %s271
      %p273 = pneg %p53
      %p274 = pneg %p50
      %p275 = pneg %p74
      %p276 = pneg %p71
      %p277 = pneg %p95
      %p278 = pneg %p92
      %p279 = pneg %p116
      %p280 = pneg %p113
      %p281 = pneg %p137
      %p282 = pneg %p134
      %p283 = pneg %p158
      %p284 = pneg %p155
      %p285 = pneg %p179
      %p286 = pneg %p176
      %p287 = pneg %p207
      %p288 = pneg %p204
      %s289 = smul.u32 2, %s23
      %p290 = scmp.lt.s32.totalorder %s22, 1
      %s291 = scalar_select %p290, %s22, 1
      %p292 = scmp.lt.s32.totalorder %s289, 1
      %s293 = scalar_select %p292, %s289, 1
      %s294 = smul.addr %s291, 2
      %s295 = sadd.s32 %s293, %s294
      %s296 = scalar_lea.vmem %s7, %s295
      %s297 = smul.u32 2, %s23
      %p298 = scmp.lt.s32.totalorder %s22, 1
      %s299 = scalar_select %p298, %s22, 1
      %p300 = scmp.lt.s32.totalorder %s297, 1
      %s301 = scalar_select %p300, %s297, 1
      %s302 = smul.addr %s299, 2
      %s303 = sadd.s32 %s301, %s302
      %s304 = smul.addr %s303, 2
      %s305 = scalar_lea.vmem %s0, %s304
      %s306 = smul.u32 2, %s23
      %s307 = smul.u32 2, %s23
      %p308 = scmp.lt.s32.totalorder %s22, 1
      %s309 = scalar_select %p308, %s22, 1
      %p310 = scmp.lt.s32.totalorder %s307, 1
      %s311 = scalar_select %p310, %s307, 1
      %s312 = smul.addr %s309, 2
      %s313 = sadd.s32 %s311, %s312
      %s314 = scalar_lea.vmem %s7, %s313
      %s315 = smul.u32 2, %s23
      %v317 = vld [vmem:[%s1] sm:$0xf]
      %v318 = vld [vmem:[%s1 + $0x4] sm:$0xf]
      %v319 = vld [vmem:[%s1 + $0x8] sm:$0xf]
      %v320 = vld [vmem:[%s1 + $0xc] sm:$0xf]
      %v321 = vld [vmem:[%s1 + $0x10] sm:$0xf]
      %v322 = vld [vmem:[%s1 + $0x14] sm:$0xf]
      %v323 = vld [vmem:[%s1 + $0x18] sm:$0xf]
      %v324 = vld [vmem:[%s1 + $0x1c] sm:$0xf]
      %v325 = vld [vmem:[%s305] sm:$0xf]
      %v326 = vld [vmem:[%s2] sm:$0xff]
      %v327 = vld [vmem:[%s2 + $0x8] sm:$0xff]
      %v328 = vld [vmem:[%s2 + $0x10] sm:$0xff]
      %v329 = vld [vmem:[%s2 + $0x18] sm:$0xff]
      %v330 = vld [vmem:[%s2 + $0x20] sm:$0xff]
      %v331 = vld [vmem:[%s2 + $0x28] sm:$0xff]
      %v332 = vld [vmem:[%s2 + $0x30] sm:$0xff]
      %v333 = vld [vmem:[%s2 + $0x38] sm:$0xff]
      %335 = vset.pattern.permute.xlu0 0
      %336 = vperm.xlu0 %335, %v326
      %v337 = vpop.permute.xlu0 %336
      %340 = vset.pattern.permute.xlu0 0
      %341 = vperm.xlu0 %340, %v327
      %v342 = vpop.permute.xlu0 %341
      %345 = vset.pattern.permute.xlu0 0
      %346 = vperm.xlu0 %345, %v328
      %v347 = vpop.permute.xlu0 %346
      %350 = vset.pattern.permute.xlu0 0
      %351 = vperm.xlu0 %350, %v329
      %v352 = vpop.permute.xlu0 %351
      %355 = vset.pattern.permute.xlu0 0
      %356 = vperm.xlu0 %355, %v330
      %v357 = vpop.permute.xlu0 %356
      %360 = vset.pattern.permute.xlu0 0
      %361 = vperm.xlu0 %360, %v331
      %v362 = vpop.permute.xlu0 %361
      %365 = vset.pattern.permute.xlu0 0
      %366 = vperm.xlu0 %365, %v332
      %v367 = vpop.permute.xlu0 %366
      %370 = vset.pattern.permute.xlu0 0
      %371 = vperm.xlu0 %370, %v333
      %v372 = vpop.permute.xlu0 %371
      %v382 = vunpack.c.l.b16 %v317
      %v383 = vunpack.c.l.b16 %v318
      %v384 = vunpack.c.l.b16 %v319
      %v385 = vunpack.c.l.b16 %v320
      %v386 = vunpack.c.l.b16 %v321
      %v387 = vunpack.c.l.b16 %v322
      %v388 = vunpack.c.l.b16 %v323
      %v389 = vunpack.c.l.b16 %v324
      %v390 = vpack.c.b16 %v383, %v382
      %v391 = vpack.c.b16 %v385, %v384
      %v392 = vpack.c.b16 %v387, %v386
      %v393 = vpack.c.b16 %v389, %v388
      %v396 = vunpack.c.l.s4 1983009808
      %v397 = vunpack.c.0.s8 %v396
      %v398 = vlaneseq
      %v399 = vshrl.u32 %v398, 7
      %v400 = vsub.s32 %v397, %v399
      %v401 = vrot.slane %v325, %v400
      %v402 = vcombine.high %v401, %v401
      %vm403 = vcmask 31744
      %v405 = vsel %vm403, %v390, 0
      %v408 = vsel %vm403, %v391, 0
      %v411 = vsel %vm403, %v392, 0
      %v414 = vsel %vm403, %v393, 0
      %vm416 = vcmask 1041408
      %v418 = vsel %vm416, %v401, 0
      %v421 = vsel %vm416, %v402, 0
      %423 = vmatprep.subr.bf16.mxu0 0
      %424 = vmatpush1.bf16.msra.mxu0 0
      %425 = vmatprep.subr.bf16.mxu0 0
      %426 = vmatpush1.bf16.msra.mxu0 0
      %427 = vmatprep.subr.bf16.mxu0 0
      %428 = vmatpush1.bf16.msra.mxu0 0
      %429 = vmatprep.subr.bf16.mxu0 0
      %430 = vmatpush1.bf16.msra.mxu0 0
      %431 = vmatprep.subr.bf16.mxu0 0
      %432 = vmatpush1.bf16.msra.mxu0 0
      %433 = vmatprep.subr.bf16.mxu0 0
      %434 = vmatpush1.bf16.msra.mxu0 0
      %435 = vmatprep.subr.bf16.mxu0 0
      %436 = vmatpush1.bf16.msra.mxu0 0
      %437 = vmatprep.subr.bf16.mxu0 %v421
      %438 = vmatpush1.bf16.msra.mxu0 %v418
      %439 = vmatprep.subr.bf16.mxu0 0
      %440 = vmatpush2.bf16.msra.mxu0 0
      %441 = vmatprep.subr.bf16.mxu0 0
      %442 = vmatpush2.bf16.msra.mxu0 0
      %443 = vmatprep.subr.bf16.mxu0 0
      %444 = vmatpush2.bf16.msra.mxu0 0
      %445 = vmatprep.subr.bf16.mxu0 0
      %446 = vmatpush2.bf16.msra.mxu0 0
      %447 = vmatprep.subr.bf16.mxu0 0
      %448 = vmatpush2.bf16.msra.mxu0 0
      %449 = vmatprep.subr.bf16.mxu0 0
      %450 = vmatpush2.bf16.msra.mxu0 0
      %451 = vmatprep.subr.bf16.mxu0 0
      %452 = vmatpush2.bf16.msra.mxu0 0
      %453 = vmatprep.subr.bf16.mxu0 0
      %454 = vmatpush2.bf16.msra.mxu0 0
      %455 = vmatprep.mubr.bf16.mxu0 0
      %456 = vmatmul.mubr.bf16.gmra.mxu0 %v405
      %v457 = vpop.f32.mrf.mxu0
      %v458 = vadd.f32 %v337, %v457
      %v459 = vpop.f32.mrf.mxu0
      %v460 = vadd.f32 %v337, %v459
      %v461 = vpop.f32.mrf.mxu0
      %v462 = vadd.f32 %v342, %v461
      %v463 = vpop.f32.mrf.mxu0
      %v464 = vadd.f32 %v342, %v463
      %465 = vmatprep.mubr.bf16.mxu0 0
      %466 = vmatmul.mubr.bf16.gmra.mxu0 %v408
      %v467 = vpop.f32.mrf.mxu0
      %v468 = vadd.f32 %v347, %v467
      %v469 = vpop.f32.mrf.mxu0
      %v470 = vadd.f32 %v347, %v469
      %v471 = vpop.f32.mrf.mxu0
      %v472 = vadd.f32 %v352, %v471
      %v473 = vpop.f32.mrf.mxu0
      %v474 = vadd.f32 %v352, %v473
      %475 = vmatprep.mubr.bf16.mxu0 0
      %476 = vmatmul.mubr.bf16.gmra.mxu0 %v411
      %v477 = vpop.f32.mrf.mxu0
      %v478 = vadd.f32 %v357, %v477
      %v479 = vpop.f32.mrf.mxu0
      %v480 = vadd.f32 %v357, %v479
      %v481 = vpop.f32.mrf.mxu0
      %v482 = vadd.f32 %v362, %v481
      %v483 = vpop.f32.mrf.mxu0
      %v484 = vadd.f32 %v362, %v483
      %485 = vmatprep.mubr.bf16.mxu0 0
      %486 = vmatmul.mubr.bf16.gmra.mxu0 %v414
      %v487 = vpop.f32.mrf.mxu0
      %v488 = vadd.f32 %v367, %v487
      %v489 = vpop.f32.mrf.mxu0
      %v490 = vadd.f32 %v367, %v489
      %v491 = vpop.f32.mrf.mxu0
      %v492 = vadd.f32 %v372, %v491
      %v493 = vpop.f32.mrf.mxu0
      %v494 = vadd.f32 %v372, %v493
      %495 = vdwg.mxu0
      %vm496 = vcmp.ge.f32.partialorder %v458, 0.0
      %vm497 = vcmp.ge.f32.partialorder %v460, 0.0
      %vm498 = vcmp.ge.f32.partialorder %v462, 0.0
      %vm499 = vcmp.ge.f32.partialorder %v464, 0.0
      %vm500 = vcmp.ge.f32.partialorder %v468, 0.0
      %vm501 = vcmp.ge.f32.partialorder %v470, 0.0
      %vm502 = vcmp.ge.f32.partialorder %v472, 0.0
      %vm503 = vcmp.ge.f32.partialorder %v474, 0.0
      %vm504 = vcmp.ge.f32.partialorder %v478, 0.0
      %vm505 = vcmp.ge.f32.partialorder %v480, 0.0
      %vm506 = vcmp.ge.f32.partialorder %v482, 0.0
      %vm507 = vcmp.ge.f32.partialorder %v484, 0.0
      %vm508 = vcmp.ge.f32.partialorder %v488, 0.0
      %vm509 = vcmp.ge.f32.partialorder %v490, 0.0
      %vm510 = vcmp.ge.f32.partialorder %v492, 0.0
      %vm511 = vcmp.ge.f32.partialorder %v494, 0.0
      %v512 = vmul.f32 %v458, 0.2
      %v513 = vmul.f32 %v460, 0.2
      %v514 = vmul.f32 %v462, 0.2
      %v515 = vmul.f32 %v464, 0.2
      %v516 = vmul.f32 %v468, 0.2
      %v517 = vmul.f32 %v470, 0.2
      %v518 = vmul.f32 %v472, 0.2
      %v519 = vmul.f32 %v474, 0.2
      %v520 = vmul.f32 %v478, 0.2
      %v521 = vmul.f32 %v480, 0.2
      %v522 = vmul.f32 %v482, 0.2
      %v523 = vmul.f32 %v484, 0.2
      %v524 = vmul.f32 %v488, 0.2
      %v525 = vmul.f32 %v490, 0.2
      %v526 = vmul.f32 %v492, 0.2
      %v527 = vmul.f32 %v494, 0.2
      %v528 = vsel %vm496, %v458, %v512
      %v529 = vsel %vm497, %v460, %v513
      %v530 = vsel %vm498, %v462, %v514
      %v531 = vsel %vm499, %v464, %v515
      %v532 = vsel %vm500, %v468, %v516
      %v533 = vsel %vm501, %v470, %v517
      %v534 = vsel %vm502, %v472, %v518
      %v535 = vsel %vm503, %v474, %v519
      %v536 = vsel %vm504, %v478, %v520
      %v537 = vsel %vm505, %v480, %v521
      %v538 = vsel %vm506, %v482, %v522
      %v539 = vsel %vm507, %v484, %v523
      %v540 = vsel %vm508, %v488, %v524
      %v541 = vsel %vm509, %v490, %v525
      %v542 = vsel %vm510, %v492, %v526
      %v543 = vsel %vm511, %v494, %v527
      %v544 = vld [vmem:[%s3] sm:$0xf]
      %v545 = vld [vmem:[%s3 + $0x4] sm:$0xf]
      %v546 = vld [vmem:[%s3 + $0x8] sm:$0xf]
      %v547 = vld [vmem:[%s3 + $0xc] sm:$0xf]
      %v548 = vld [vmem:[%s3 + $0x10] sm:$0xf]
      %v549 = vld [vmem:[%s3 + $0x14] sm:$0xf]
      %v550 = vld [vmem:[%s3 + $0x18] sm:$0xf]
      %v551 = vld [vmem:[%s3 + $0x1c] sm:$0xf]
      %v552 = vld [vmem:[%s3 + $0x20] sm:$0xf]
      %v553 = vld [vmem:[%s3 + $0x24] sm:$0xf]
      %v554 = vld [vmem:[%s3 + $0x28] sm:$0xf]
      %v555 = vld [vmem:[%s3 + $0x2c] sm:$0xf]
      %v556 = vld [vmem:[%s3 + $0x30] sm:$0xf]
      %v557 = vld [vmem:[%s3 + $0x34] sm:$0xf]
      %v558 = vld [vmem:[%s3 + $0x38] sm:$0xf]
      %v559 = vld [vmem:[%s3 + $0x3c] sm:$0xf]
      %v560 = vpack.c.bf16 %v530, %v528
      %v561 = vpack.c.bf16 %v531, %v529
      %v562 = vpack.c.bf16 %v534, %v532
      %v563 = vpack.c.bf16 %v535, %v533
      %v564 = vpack.c.bf16 %v538, %v536
      %v565 = vpack.c.bf16 %v539, %v537
      %v566 = vpack.c.bf16 %v542, %v540
      %v567 = vpack.c.bf16 %v543, %v541
      %v584 = vunpack.c.l.b16 %v544
      %v585 = vunpack.c.l.b16 %v545
      %v586 = vunpack.c.l.b16 %v546
      %v587 = vunpack.c.l.b16 %v547
      %v588 = vunpack.c.l.b16 %v548
      %v589 = vunpack.c.l.b16 %v549
      %v590 = vunpack.c.l.b16 %v550
      %v591 = vunpack.c.l.b16 %v551
      %v592 = vunpack.c.l.b16 %v552
      %v593 = vunpack.c.l.b16 %v553
      %v594 = vunpack.c.l.b16 %v554
      %v595 = vunpack.c.l.b16 %v555
      %v596 = vunpack.c.l.b16 %v556
      %v597 = vunpack.c.l.b16 %v557
      %v598 = vunpack.c.l.b16 %v558
      %v599 = vunpack.c.l.b16 %v559
      %v600 = vpack.c.b16 %v585, %v584
      %v601 = vpack.c.b16 %v587, %v586
      %v602 = vpack.c.b16 %v589, %v588
      %v603 = vpack.c.b16 %v591, %v590
      %v604 = vpack.c.b16 %v593, %v592
      %v605 = vpack.c.b16 %v595, %v594
      %v606 = vpack.c.b16 %v597, %v596
      %v607 = vpack.c.b16 %v599, %v598
      %vm608 = vcmask 523264
      %v610 = vsel %vm608, %v600, 0
      %v613 = vsel %vm608, %v601, 0
      %v616 = vsel %vm608, %v602, 0
      %v619 = vsel %vm608, %v603, 0
      %v622 = vsel %vm608, %v604, 0
      %v625 = vsel %vm608, %v605, 0
      %v628 = vsel %vm608, %v606, 0
      %v631 = vsel %vm608, %v607, 0
      %633 = vmatprep.subr.bf16.mxu0 0
      %634 = vmatpush1.bf16.msra.mxu0 0
      %635 = vmatprep.subr.bf16.mxu0 0
      %636 = vmatpush1.bf16.msra.mxu0 0
      %637 = vmatprep.subr.bf16.mxu0 0
      %638 = vmatpush1.bf16.msra.mxu0 0
      %639 = vmatprep.subr.bf16.mxu0 0
      %640 = vmatpush1.bf16.msra.mxu0 0
      %641 = vmatprep.subr.bf16.mxu0 %v567
      %642 = vmatpush1.bf16.msra.mxu0 %v566
      %643 = vmatprep.subr.bf16.mxu0 %v565
      %644 = vmatpush1.bf16.msra.mxu0 %v564
      %645 = vmatprep.subr.bf16.mxu0 %v563
      %646 = vmatpush1.bf16.msra.mxu0 %v562
      %647 = vmatprep.subr.bf16.mxu0 %v561
      %648 = vmatpush1.bf16.msra.mxu0 %v560
      %649 = vmatprep.subr.bf16.mxu0 0
      %650 = vmatpush2.bf16.msra.mxu0 0
      %651 = vmatprep.subr.bf16.mxu0 0
      %652 = vmatpush2.bf16.msra.mxu0 0
      %653 = vmatprep.subr.bf16.mxu0 0
      %654 = vmatpush2.bf16.msra.mxu0 0
      %655 = vmatprep.subr.bf16.mxu0 0
      %656 = vmatpush2.bf16.msra.mxu0 0
      %657 = vmatprep.subr.bf16.mxu0 0
      %658 = vmatpush2.bf16.msra.mxu0 0
      %659 = vmatprep.subr.bf16.mxu0 0
      %660 = vmatpush2.bf16.msra.mxu0 0
      %661 = vmatprep.subr.bf16.mxu0 0
      %662 = vmatpush2.bf16.msra.mxu0 0
      %663 = vmatprep.subr.bf16.mxu0 0
      %664 = vmatpush2.bf16.msra.mxu0 0
      %665 = vmatprep.mubr.bf16.mxu0 0
      %666 = vmatmul.mubr.bf16.gmra.mxu0 %v610
      %v667 = vpop.f32.mrf.mxu0
      %v668 = vadd.f32 0.0, %v667
      %v669 = vpop.f32.mrf.mxu0
      %v670 = vadd.f32 0.0, %v669
      %v671 = vpop.f32.mrf.mxu0
      %v672 = vadd.f32 0.0, %v671
      %v673 = vpop.f32.mrf.mxu0
      %v674 = vadd.f32 0.0, %v673
      %675 = vmatprep.mubr.bf16.mxu0 0
      %676 = vmatmul.mubr.bf16.gmra.mxu0 %v613
      %v677 = vpop.f32.mrf.mxu0
      %v678 = vadd.f32 0.0, %v677
      %v679 = vpop.f32.mrf.mxu0
      %v680 = vadd.f32 0.0, %v679
      %v681 = vpop.f32.mrf.mxu0
      %v682 = vadd.f32 0.0, %v681
      %v683 = vpop.f32.mrf.mxu0
      %v684 = vadd.f32 0.0, %v683
      %685 = vmatprep.mubr.bf16.mxu0 0
      %686 = vmatmul.mubr.bf16.gmra.mxu0 %v616
      %v687 = vpop.f32.mrf.mxu0
      %v688 = vadd.f32 0.0, %v687
      %v689 = vpop.f32.mrf.mxu0
      %v690 = vadd.f32 0.0, %v689
      %v691 = vpop.f32.mrf.mxu0
      %v692 = vadd.f32 0.0, %v691
      %v693 = vpop.f32.mrf.mxu0
      %v694 = vadd.f32 0.0, %v693
      %695 = vmatprep.mubr.bf16.mxu0 0
      %696 = vmatmul.mubr.bf16.gmra.mxu0 %v619
      %v697 = vpop.f32.mrf.mxu0
      %v698 = vadd.f32 0.0, %v697
      %v699 = vpop.f32.mrf.mxu0
      %v700 = vadd.f32 0.0, %v699
      %v701 = vpop.f32.mrf.mxu0
      %v702 = vadd.f32 0.0, %v701
      %v703 = vpop.f32.mrf.mxu0
      %v704 = vadd.f32 0.0, %v703
      %705 = vmatprep.mubr.bf16.mxu0 0
      %706 = vmatmul.mubr.bf16.gmra.mxu0 %v622
      %v707 = vpop.f32.mrf.mxu0
      %v708 = vadd.f32 0.0, %v707
      %v709 = vpop.f32.mrf.mxu0
      %v710 = vadd.f32 0.0, %v709
      %v711 = vpop.f32.mrf.mxu0
      %v712 = vadd.f32 0.0, %v711
      %v713 = vpop.f32.mrf.mxu0
      %v714 = vadd.f32 0.0, %v713
      %715 = vmatprep.mubr.bf16.mxu0 0
      %716 = vmatmul.mubr.bf16.gmra.mxu0 %v625
      %v717 = vpop.f32.mrf.mxu0
      %v718 = vadd.f32 0.0, %v717
      %v719 = vpop.f32.mrf.mxu0
      %v720 = vadd.f32 0.0, %v719
      %v721 = vpop.f32.mrf.mxu0
      %v722 = vadd.f32 0.0, %v721
      %v723 = vpop.f32.mrf.mxu0
      %v724 = vadd.f32 0.0, %v723
      %725 = vmatprep.mubr.bf16.mxu0 0
      %726 = vmatmul.mubr.bf16.gmra.mxu0 %v628
      %v727 = vpop.f32.mrf.mxu0
      %v728 = vadd.f32 0.0, %v727
      %v729 = vpop.f32.mrf.mxu0
      %v730 = vadd.f32 0.0, %v729
      %v731 = vpop.f32.mrf.mxu0
      %v732 = vadd.f32 0.0, %v731
      %v733 = vpop.f32.mrf.mxu0
      %v734 = vadd.f32 0.0, %v733
      %735 = vmatprep.mubr.bf16.mxu0 0
      %736 = vmatmul.mubr.bf16.gmra.mxu0 %v631
      %v737 = vpop.f32.mrf.mxu0
      %v738 = vadd.f32 0.0, %v737
      %v739 = vpop.f32.mrf.mxu0
      %v740 = vadd.f32 0.0, %v739
      %v741 = vpop.f32.mrf.mxu0
      %v742 = vadd.f32 0.0, %v741
      %v743 = vpop.f32.mrf.mxu0
      %v744 = vadd.f32 0.0, %v743
      %745 = vdwg.mxu0
      %v746 = vld [vmem:[%s4] sm:$0xff]
      %v747 = vld [vmem:[%s4 + $0x8] sm:$0xff]
      %v748 = vld [vmem:[%s4 + $0x10] sm:$0xff]
      %v749 = vld [vmem:[%s4 + $0x18] sm:$0xff]
      %v750 = vld [vmem:[%s4 + $0x20] sm:$0xff]
      %v751 = vld [vmem:[%s4 + $0x28] sm:$0xff]
      %v752 = vld [vmem:[%s4 + $0x30] sm:$0xff]
      %v753 = vld [vmem:[%s4 + $0x38] sm:$0xff]
      %v754 = vld [vmem:[%s4 + $0x40] sm:$0xff]
      %v755 = vld [vmem:[%s4 + $0x48] sm:$0xff]
      %v756 = vld [vmem:[%s4 + $0x50] sm:$0xff]
      %v757 = vld [vmem:[%s4 + $0x58] sm:$0xff]
      %v758 = vld [vmem:[%s4 + $0x60] sm:$0xff]
      %v759 = vld [vmem:[%s4 + $0x68] sm:$0xff]
      %v760 = vld [vmem:[%s4 + $0x70] sm:$0xff]
      %v761 = vld [vmem:[%s4 + $0x78] sm:$0xff]
      %763 = vset.pattern.permute.xlu0 0
      %764 = vperm.xlu0 %763, %v746
      %v765 = vpop.permute.xlu0 %764
      %768 = vset.pattern.permute.xlu0 0
      %769 = vperm.xlu0 %768, %v747
      %v770 = vpop.permute.xlu0 %769
      %773 = vset.pattern.permute.xlu0 0
      %774 = vperm.xlu0 %773, %v748
      %v775 = vpop.permute.xlu0 %774
      %778 = vset.pattern.permute.xlu0 0
      %779 = vperm.xlu0 %778, %v749
      %v780 = vpop.permute.xlu0 %779
      %783 = vset.pattern.permute.xlu0 0
      %784 = vperm.xlu0 %783, %v750
      %v785 = vpop.permute.xlu0 %784
      %788 = vset.pattern.permute.xlu0 0
      %789 = vperm.xlu0 %788, %v751
      %v790 = vpop.permute.xlu0 %789
      %793 = vset.pattern.permute.xlu0 0
      %794 = vperm.xlu0 %793, %v752
      %v795 = vpop.permute.xlu0 %794
      %798 = vset.pattern.permute.xlu0 0
      %799 = vperm.xlu0 %798, %v753
      %v800 = vpop.permute.xlu0 %799
      %803 = vset.pattern.permute.xlu0 0
      %804 = vperm.xlu0 %803, %v754
      %v805 = vpop.permute.xlu0 %804
      %808 = vset.pattern.permute.xlu0 0
      %809 = vperm.xlu0 %808, %v755
      %v810 = vpop.permute.xlu0 %809
      %813 = vset.pattern.permute.xlu0 0
      %814 = vperm.xlu0 %813, %v756
      %v815 = vpop.permute.xlu0 %814
      %818 = vset.pattern.permute.xlu0 0
      %819 = vperm.xlu0 %818, %v757
      %v820 = vpop.permute.xlu0 %819
      %823 = vset.pattern.permute.xlu0 0
      %824 = vperm.xlu0 %823, %v758
      %v825 = vpop.permute.xlu0 %824
      %828 = vset.pattern.permute.xlu0 0
      %829 = vperm.xlu0 %828, %v759
      %v830 = vpop.permute.xlu0 %829
      %833 = vset.pattern.permute.xlu0 0
      %834 = vperm.xlu0 %833, %v760
      %v835 = vpop.permute.xlu0 %834
      %838 = vset.pattern.permute.xlu0 0
      %839 = vperm.xlu0 %838, %v761
      %v840 = vpop.permute.xlu0 %839
      %v842 = vmul.f32 %v668, %v765
      %v843 = vmul.f32 %v670, %v765
      %v844 = vmul.f32 %v672, %v770
      %v845 = vmul.f32 %v674, %v770
      %v846 = vmul.f32 %v678, %v775
      %v847 = vmul.f32 %v680, %v775
      %v848 = vmul.f32 %v682, %v780
      %v849 = vmul.f32 %v684, %v780
      %v850 = vmul.f32 %v688, %v785
      %v851 = vmul.f32 %v690, %v785
      %v852 = vmul.f32 %v692, %v790
      %v853 = vmul.f32 %v694, %v790
      %v854 = vmul.f32 %v698, %v795
      %v855 = vmul.f32 %v700, %v795
      %v856 = vmul.f32 %v702, %v800
      %v857 = vmul.f32 %v704, %v800
      %v858 = vmul.f32 %v708, %v805
      %v859 = vmul.f32 %v710, %v805
      %v860 = vmul.f32 %v712, %v810
      %v861 = vmul.f32 %v714, %v810
      %v862 = vmul.f32 %v718, %v815
      %v863 = vmul.f32 %v720, %v815
      %v864 = vmul.f32 %v722, %v820
      %v865 = vmul.f32 %v724, %v820
      %v866 = vmul.f32 %v728, %v825
      %v867 = vmul.f32 %v730, %v825
      %v868 = vmul.f32 %v732, %v830
      %v869 = vmul.f32 %v734, %v830
      %v870 = vmul.f32 %v738, %v835
      %v871 = vmul.f32 %v740, %v835
      %v872 = vmul.f32 %v742, %v840
      %v873 = vmul.f32 %v744, %v840
      %v874 = vld [vmem:[%s5] sm:$0xff]
      %v875 = vld [vmem:[%s5 + $0x8] sm:$0xff]
      %v876 = vld [vmem:[%s5 + $0x10] sm:$0xff]
      %v877 = vld [vmem:[%s5 + $0x18] sm:$0xff]
      %v878 = vld [vmem:[%s5 + $0x20] sm:$0xff]
      %v879 = vld [vmem:[%s5 + $0x28] sm:$0xff]
      %v880 = vld [vmem:[%s5 + $0x30] sm:$0xff]
      %v881 = vld [vmem:[%s5 + $0x38] sm:$0xff]
      %v882 = vld [vmem:[%s5 + $0x40] sm:$0xff]
      %v883 = vld [vmem:[%s5 + $0x48] sm:$0xff]
      %v884 = vld [vmem:[%s5 + $0x50] sm:$0xff]
      %v885 = vld [vmem:[%s5 + $0x58] sm:$0xff]
      %v886 = vld [vmem:[%s5 + $0x60] sm:$0xff]
      %v887 = vld [vmem:[%s5 + $0x68] sm:$0xff]
      %v888 = vld [vmem:[%s5 + $0x70] sm:$0xff]
      %v889 = vld [vmem:[%s5 + $0x78] sm:$0xff]
      %891 = vset.pattern.permute.xlu0 0
      %892 = vperm.xlu0 %891, %v874
      %v893 = vpop.permute.xlu0 %892
      %896 = vset.pattern.permute.xlu0 0
      %897 = vperm.xlu0 %896, %v875
      %v898 = vpop.permute.xlu0 %897
      %901 = vset.pattern.permute.xlu0 0
      %902 = vperm.xlu0 %901, %v876
      %v903 = vpop.permute.xlu0 %902
      %906 = vset.pattern.permute.xlu0 0
      %907 = vperm.xlu0 %906, %v877
      %v908 = vpop.permute.xlu0 %907
      %911 = vset.pattern.permute.xlu0 0
      %912 = vperm.xlu0 %911, %v878
      %v913 = vpop.permute.xlu0 %912
      %916 = vset.pattern.permute.xlu0 0
      %917 = vperm.xlu0 %916, %v879
      %v918 = vpop.permute.xlu0 %917
      %921 = vset.pattern.permute.xlu0 0
      %922 = vperm.xlu0 %921, %v880
      %v923 = vpop.permute.xlu0 %922
      %926 = vset.pattern.permute.xlu0 0
      %927 = vperm.xlu0 %926, %v881
      %v928 = vpop.permute.xlu0 %927
      %931 = vset.pattern.permute.xlu0 0
      %932 = vperm.xlu0 %931, %v882
      %v933 = vpop.permute.xlu0 %932
      %936 = vset.pattern.permute.xlu0 0
      %937 = vperm.xlu0 %936, %v883
      %v938 = vpop.permute.xlu0 %937
      %941 = vset.pattern.permute.xlu0 0
      %942 = vperm.xlu0 %941, %v884
      %v943 = vpop.permute.xlu0 %942
      %946 = vset.pattern.permute.xlu0 0
      %947 = vperm.xlu0 %946, %v885
      %v948 = vpop.permute.xlu0 %947
      %951 = vset.pattern.permute.xlu0 0
      %952 = vperm.xlu0 %951, %v886
      %v953 = vpop.permute.xlu0 %952
      %956 = vset.pattern.permute.xlu0 0
      %957 = vperm.xlu0 %956, %v887
      %v958 = vpop.permute.xlu0 %957
      %961 = vset.pattern.permute.xlu0 0
      %962 = vperm.xlu0 %961, %v888
      %v963 = vpop.permute.xlu0 %962
      %966 = vset.pattern.permute.xlu0 0
      %967 = vperm.xlu0 %966, %v889
      %v968 = vpop.permute.xlu0 %967
      %v970 = vadd.f32 %v842, %v893
      %v971 = vadd.f32 %v843, %v893
      %v972 = vadd.f32 %v844, %v898
      %v973 = vadd.f32 %v845, %v898
      %v974 = vadd.f32 %v846, %v903
      %v975 = vadd.f32 %v847, %v903
      %v976 = vadd.f32 %v848, %v908
      %v977 = vadd.f32 %v849, %v908
      %v978 = vadd.f32 %v850, %v913
      %v979 = vadd.f32 %v851, %v913
      %v980 = vadd.f32 %v852, %v918
      %v981 = vadd.f32 %v853, %v918
      %v982 = vadd.f32 %v854, %v923
      %v983 = vadd.f32 %v855, %v923
      %v984 = vadd.f32 %v856, %v928
      %v985 = vadd.f32 %v857, %v928
      %v986 = vadd.f32 %v858, %v933
      %v987 = vadd.f32 %v859, %v933
      %v988 = vadd.f32 %v860, %v938
      %v989 = vadd.f32 %v861, %v938
      %v990 = vadd.f32 %v862, %v943
      %v991 = vadd.f32 %v863, %v943
      %v992 = vadd.f32 %v864, %v948
      %v993 = vadd.f32 %v865, %v948
      %v994 = vadd.f32 %v866, %v953
      %v995 = vadd.f32 %v867, %v953
      %v996 = vadd.f32 %v868, %v958
      %v997 = vadd.f32 %v869, %v958
      %v998 = vadd.f32 %v870, %v963
      %v999 = vadd.f32 %v871, %v963
      %v1000 = vadd.f32 %v872, %v968
      %v1001 = vadd.f32 %v873, %v968
      %vm1002 = vcmp.ge.f32.partialorder %v970, 0.0
      %vm1003 = vcmp.ge.f32.partialorder %v971, 0.0
      %vm1004 = vcmp.ge.f32.partialorder %v972, 0.0
      %vm1005 = vcmp.ge.f32.partialorder %v973, 0.0
      %vm1006 = vcmp.ge.f32.partialorder %v974, 0.0
      %vm1007 = vcmp.ge.f32.partialorder %v975, 0.0
      %vm1008 = vcmp.ge.f32.partialorder %v976, 0.0
      %vm1009 = vcmp.ge.f32.partialorder %v977, 0.0
      %vm1010 = vcmp.ge.f32.partialorder %v978, 0.0
      %vm1011 = vcmp.ge.f32.partialorder %v979, 0.0
      %vm1012 = vcmp.ge.f32.partialorder %v980, 0.0
      %vm1013 = vcmp.ge.f32.partialorder %v981, 0.0
      %vm1014 = vcmp.ge.f32.partialorder %v982, 0.0
      %vm1015 = vcmp.ge.f32.partialorder %v983, 0.0
      %vm1016 = vcmp.ge.f32.partialorder %v984, 0.0
      %vm1017 = vcmp.ge.f32.partialorder %v985, 0.0
      %vm1018 = vcmp.ge.f32.partialorder %v986, 0.0
      %vm1019 = vcmp.ge.f32.partialorder %v987, 0.0
      %vm1020 = vcmp.ge.f32.partialorder %v988, 0.0
      %vm1021 = vcmp.ge.f32.partialorder %v989, 0.0
      %vm1022 = vcmp.ge.f32.partialorder %v990, 0.0
      %vm1023 = vcmp.ge.f32.partialorder %v991, 0.0
      %vm1024 = vcmp.ge.f32.partialorder %v992, 0.0
      %vm1025 = vcmp.ge.f32.partialorder %v993, 0.0
      %vm1026 = vcmp.ge.f32.partialorder %v994, 0.0
      %vm1027 = vcmp.ge.f32.partialorder %v995, 0.0
      %vm1028 = vcmp.ge.f32.partialorder %v996, 0.0
      %vm1029 = vcmp.ge.f32.partialorder %v997, 0.0
      %vm1030 = vcmp.ge.f32.partialorder %v998, 0.0
      %vm1031 = vcmp.ge.f32.partialorder %v999, 0.0
      %vm1032 = vcmp.ge.f32.partialorder %v1000, 0.0
      %vm1033 = vcmp.ge.f32.partialorder %v1001, 0.0
      %v1034 = vmul.f32 %v970, 0.2
      %v1035 = vmul.f32 %v971, 0.2
      %v1036 = vmul.f32 %v972, 0.2
      %v1037 = vmul.f32 %v973, 0.2
      %v1038 = vmul.f32 %v974, 0.2
      %v1039 = vmul.f32 %v975, 0.2
      %v1040 = vmul.f32 %v976, 0.2
      %v1041 = vmul.f32 %v977, 0.2
      %v1042 = vmul.f32 %v978, 0.2
      %v1043 = vmul.f32 %v979, 0.2
      %v1044 = vmul.f32 %v980, 0.2
      %v1045 = vmul.f32 %v981, 0.2
      %v1046 = vmul.f32 %v982, 0.2
      %v1047 = vmul.f32 %v983, 0.2
      %v1048 = vmul.f32 %v984, 0.2
      %v1049 = vmul.f32 %v985, 0.2
      %v1050 = vmul.f32 %v986, 0.2
      %v1051 = vmul.f32 %v987, 0.2
      %v1052 = vmul.f32 %v988, 0.2
      %v1053 = vmul.f32 %v989, 0.2
      %v1054 = vmul.f32 %v990, 0.2
      %v1055 = vmul.f32 %v991, 0.2
      %v1056 = vmul.f32 %v992, 0.2
      %v1057 = vmul.f32 %v993, 0.2
      %v1058 = vmul.f32 %v994, 0.2
      %v1059 = vmul.f32 %v995, 0.2
      %v1060 = vmul.f32 %v996, 0.2
      %v1061 = vmul.f32 %v997, 0.2
      %v1062 = vmul.f32 %v998, 0.2
      %v1063 = vmul.f32 %v999, 0.2
      %v1064 = vmul.f32 %v1000, 0.2
      %v1065 = vmul.f32 %v1001, 0.2
      %v1066 = vsel %vm1002, %v970, %v1034
      %v1067 = vsel %vm1003, %v971, %v1035
      %v1068 = vsel %vm1004, %v972, %v1036
      %v1069 = vsel %vm1005, %v973, %v1037
      %v1070 = vsel %vm1006, %v974, %v1038
      %v1071 = vsel %vm1007, %v975, %v1039
      %v1072 = vsel %vm1008, %v976, %v1040
      %v1073 = vsel %vm1009, %v977, %v1041
      %v1074 = vsel %vm1010, %v978, %v1042
      %v1075 = vsel %vm1011, %v979, %v1043
      %v1076 = vsel %vm1012, %v980, %v1044
      %v1077 = vsel %vm1013, %v981, %v1045
      %v1078 = vsel %vm1014, %v982, %v1046
      %v1079 = vsel %vm1015, %v983, %v1047
      %v1080 = vsel %vm1016, %v984, %v1048
      %v1081 = vsel %vm1017, %v985, %v1049
      %v1082 = vsel %vm1018, %v986, %v1050
      %v1083 = vsel %vm1019, %v987, %v1051
      %v1084 = vsel %vm1020, %v988, %v1052
      %v1085 = vsel %vm1021, %v989, %v1053
      %v1086 = vsel %vm1022, %v990, %v1054
      %v1087 = vsel %vm1023, %v991, %v1055
      %v1088 = vsel %vm1024, %v992, %v1056
      %v1089 = vsel %vm1025, %v993, %v1057
      %v1090 = vsel %vm1026, %v994, %v1058
      %v1091 = vsel %vm1027, %v995, %v1059
      %v1092 = vsel %vm1028, %v996, %v1060
      %v1093 = vsel %vm1029, %v997, %v1061
      %v1094 = vsel %vm1030, %v998, %v1062
      %v1095 = vsel %vm1031, %v999, %v1063
      %v1096 = vsel %vm1032, %v1000, %v1064
      %v1097 = vsel %vm1033, %v1001, %v1065
      %v1098 = vld [vmem:[%s6] sm:$0x1]
      %1099 = vmatprep.subr.mxu0 %v1097
      %1100 = vmatpush1.msra.mxu0 %v1096
      %1101 = vmatprep.subr.mxu0 %v1095
      %1102 = vmatpush1.msra.mxu0 %v1094
      %1103 = vmatprep.subr.mxu0 %v1093
      %1104 = vmatpush1.msra.mxu0 %v1092
      %1105 = vmatprep.subr.mxu0 %v1091
      %1106 = vmatpush1.msra.mxu0 %v1090
      %1107 = vmatprep.subr.mxu0 %v1089
      %1108 = vmatpush1.msra.mxu0 %v1088
      %1109 = vmatprep.subr.mxu0 %v1087
      %1110 = vmatpush1.msra.mxu0 %v1086
      %1111 = vmatprep.subr.mxu0 %v1085
      %1112 = vmatpush1.msra.mxu0 %v1084
      %1113 = vmatprep.subr.mxu0 %v1083
      %1114 = vmatpush1.msra.mxu0 %v1082
      %1115 = vmatprep.subr.mxu0 %v1081
      %1116 = vmatpush1.msra.mxu0 %v1080
      %1117 = vmatprep.subr.mxu0 %v1079
      %1118 = vmatpush1.msra.mxu0 %v1078
      %1119 = vmatprep.subr.mxu0 %v1077
      %1120 = vmatpush1.msra.mxu0 %v1076
      %1121 = vmatprep.subr.mxu0 %v1075
      %1122 = vmatpush1.msra.mxu0 %v1074
      %1123 = vmatprep.subr.mxu0 %v1073
      %1124 = vmatpush1.msra.mxu0 %v1072
      %1125 = vmatprep.subr.mxu0 %v1071
      %1126 = vmatpush1.msra.mxu0 %v1070
      %1127 = vmatprep.subr.mxu0 %v1069
      %1128 = vmatpush1.msra.mxu0 %v1068
      %1129 = vmatprep.subr.mxu0 %v1067
      %1130 = vmatpush1.msra.mxu0 %v1066
      %1131 = vmatprep.subr.mxu0 0.0
      %1132 = vmatpush2.msra.mxu0 0.0
      %1133 = vmatprep.subr.mxu0 0.0
      %1134 = vmatpush2.msra.mxu0 0.0
      %1135 = vmatprep.subr.mxu0 0.0
      %1136 = vmatpush2.msra.mxu0 0.0
      %1137 = vmatprep.subr.mxu0 0.0
      %1138 = vmatpush2.msra.mxu0 0.0
      %1139 = vmatprep.subr.mxu0 0.0
      %1140 = vmatpush2.msra.mxu0 0.0
      %1141 = vmatprep.subr.mxu0 0.0
      %1142 = vmatpush2.msra.mxu0 0.0
      %1143 = vmatprep.subr.mxu0 0.0
      %1144 = vmatpush2.msra.mxu0 0.0
      %1145 = vmatprep.subr.mxu0 0.0
      %1146 = vmatpush2.msra.mxu0 0.0
      %1147 = vmatprep.subr.mxu0 0.0
      %1148 = vmatpush2.msra.mxu0 0.0
      %1149 = vmatprep.subr.mxu0 0.0
      %1150 = vmatpush2.msra.mxu0 0.0
      %1151 = vmatprep.subr.mxu0 0.0
      %1152 = vmatpush2.msra.mxu0 0.0
      %1153 = vmatprep.subr.mxu0 0.0
      %1154 = vmatpush2.msra.mxu0 0.0
      %1155 = vmatprep.subr.mxu0 0.0
      %1156 = vmatpush2.msra.mxu0 0.0
      %1157 = vmatprep.subr.mxu0 0.0
      %1158 = vmatpush2.msra.mxu0 0.0
      %1159 = vmatprep.subr.mxu0 0.0
      %1160 = vmatpush2.msra.mxu0 0.0
      %1161 = vmatprep.subr.mxu0 0.0
      %1162 = vmatpush2.msra.mxu0 0.0
      %1163 = vmatprep.mubr.f32.mxu0 0.0
      %1164 = vmatmul.mubr.f32.gmra.mxu0 %v1098
      %v1165 = vpop.f32.mrf.mxu0
      %v1166 = vadd.f32 0.0, %v1165
      %v1167 = vpop.f32.mrf.mxu0
      %v1168 = vadd.f32 0.0, %v1167
      %1169 = vdwg.mxu0
      %v1172 = vcombine.low %v1166, %v1168
      %v1174 = vunpack.c.l.s4 1966171168
      %v1175 = vunpack.c.0.s8 %v1174
      %v1176 = vlaneseq
      %v1177 = vshrl.u32 %v1176, 7
      %v1178 = vsub.s32 %v1175, %v1177
      %v1179 = vrot.slane %v1172, %v1178
      %v1181 = vunpack.c.l.s4 1966171168
      %v1182 = vunpack.c.0.s8 %v1181
      %v1183 = vlaneseq
      %v1184 = vshrl.u32 %v1183, 7
      %v1185 = vsub.s32 %v1182, %v1184
      %v1186 = vrot.slane %v1179, %v1185
      %v1188 = vlaneseq
      %vm1189 = vcmp.ge.s32.totalorder %v1188, 0
      %vm1190 = vcmp.lt.s32.totalorder %v1188, 256
      %vm1191 = vmand %vm1189, %vm1190
      %1192 = vst.msk [vmem:[%s314] sm:$0x3] %vm1191, %v1186
      %s1193 = smul.u32 2, %s23
      %p1194 = scmp.lt.s32.totalorder %s22, 1
      %s1195 = scalar_select %p1194, %s22, 1
      %p1196 = scmp.lt.s32.totalorder %s1193, 1
      %s1197 = scalar_select %p1196, %s1193, 1
      %s1198 = smul.addr %s1195, 2
      %s1199 = sadd.s32 %s1197, %s1198
      %s1200 = scalar_lea.vmem %s7, %s1199
      // Predicated region
      $region49: #{pixel_discriminator.3} parent=47 // pred_check
        %p1201 = pneg %p204
      $region50: #{pixel_discriminator.3} parent=47 // pred_check_branch
        %1203 = sbr.rel (%p1201) target = $region52
      $region51: #{pixel_discriminator.3} parent=47 // pred_region
        %s1204 = smul.u32 2, %s23
      $region52: #{pixel_discriminator.3} parent=47 // pred_fallthru
        _
    $region48: #{pixel_discriminator.3} parent=5 // pred_fallthru
      _
    %p1205 = scmp.le.s32.totalorder 2, %s13
    // Predicated region
    $region53: #{pixel_discriminator.3} parent=5 // pred_check
      %p1206 = pneg %p1205
    $region54: #{pixel_discriminator.3} parent=5 // pred_check_branch
      %1208 = sbr.rel (%p1206) target = $region56
    $region55: #{pixel_discriminator.3} parent=5 // pred_region
      %s1209 = ssub.s32 %s13, 2
      // Predicated region
      $region57: #{pixel_discriminator.3} parent=55 // pred_check
        %p1210 = pneg %p210
      $region58: #{pixel_discriminator.3} parent=55 // pred_check_branch
        %1212 = sbr.rel (%p1210) target = $region60
      $region59: #{pixel_discriminator.3} parent=55 // pred_region
        %s1213 = smul.u32 2, %s25
        %p1214 = scmp.lt.s32.totalorder %s24, 1
        %s1215 = scalar_select %p1214, %s24, 1
        %p1216 = scmp.lt.s32.totalorder %s1213, 1
        %s1217 = scalar_select %p1216, %s1213, 1
        %s1218 = smul.addr %s1215, 2
        %s1219 = sadd.s32 %s1217, %s1218
        %s1220 = scalar_lea.vmem %s7, %s1219
      $region60: #{pixel_discriminator.3} parent=55 // pred_fallthru
        _
    $region56: #{pixel_discriminator.3} parent=5 // pred_fallthru
      _
  $region6: #{pixel_discriminator.3} parent=0 // loop_footer
    %s17 = sadd.s32 1, %s13
  $region7: #{pixel_discriminator.3} parent=0 // loop_footer_branch
    %12 = sbr.rel target = $region3
  $region8: #{pixel_discriminator.3} parent=0 // loop_exit
    _

</llo_original>
